<compile_context>
chip_gen: v5e
topology: v5e:2x2
jax: 0.10.0
libtpu: 0.0.40
codegen_flags: <defaults>
</compile_context>

<pallas_src>
import jax
import jax.numpy as jnp
from jax import lax
from jax.experimental import pallas as pl
from jax.experimental.pallas import tpu as pltpu
import numpy as np


# ----------------------------------------------------------------------------
# Pallas kernel: DynamicMemory recurrence + OutputModule for one batch BLOCK.
# State is stacked as (block_b * M, E); all per-step work is one big slab.
# ----------------------------------------------------------------------------
def entnet_kernel(alpha_ref, s_ref, gsw_ref, uvw_ref, qb_ref, q_ref,
                  h0_ref, wu_ref, wh_ref, bh_ref, y_ref):
    alpha = alpha_ref[0]                       # PReLU slope (SMEM scalar)
    wu_t = wu_ref[...]                         # (E, E), pre-transposed (in, out)
    h = h0_ref[...]                            # (BM, E) stacked initial memory
    gsw = gsw_ref[0]                           # (BM, T) precomputed  w . s_t
    T = s_ref.shape[1]

    # T is small -> static unroll.
    # TODO(synk): switch to lax.fori_loop(..., unroll=k) carrying h if T grows
    # large (vreg pressure from a long static unroll).
    for t in range(T):
        s_t = s_ref[0, t]                      # (BM, E)  s_t broadcast over M
        # gate: sigmoid((h + w) . s_t) = sigmoid(h . s_t + [w . s_t precomputed])
        g = jax.nn.sigmoid(
            jnp.sum(h * s_t, axis=-1, keepdims=True) + gsw[:, t:t + 1])
        # candidate: PReLU(U(h) + V(w) + W(s_t));  V(w)+W(s_t) precomputed.
        cand = (jnp.dot(h, wu_t, preferred_element_type=jnp.float32)
                + uvw_ref[0, t])
        cand = jnp.where(cand >= 0, cand, alpha * cand)          # PReLU
        h = h + g * cand
        # L2-normalize each memory row (no epsilon: matches the reference).
        h = h * lax.rsqrt(jnp.sum(h * h, axis=-1, keepdims=True))

    # OutputModule: p = softmax_over_M(h . q); u = sum(p * h); y = q + H(u)
    qb = qb_ref[0]                             # (BM, E)  q broadcast over M
    logits = jnp.sum(h * qb, axis=-1, keepdims=True)             # (BM, 1)
    block_b = q_ref.shape[1]
    M = h.shape[0] // block_b
    us = []
    for b in range(block_b):                   # static; block_b is small
        hb = h[b * M:(b + 1) * M, :]                             # (M, E)
        lb = logits[b * M:(b + 1) * M, :]                        # (M, 1)
        lb = lb - jnp.max(lb, axis=0, keepdims=True)
        pb = jnp.exp(lb)
        pb = pb / jnp.sum(pb, axis=0, keepdims=True)             # softmax over M
        us.append(jnp.sum(pb * hb, axis=0, keepdims=True))       # (1, E)
    u = jnp.concatenate(us, axis=0)                              # (block_b, E)
    y = (q_ref[0]
         + jnp.dot(u, wh_ref[...], preferred_element_type=jnp.float32)
         + bh_ref[...])
    y_ref[0] = y                                                 # (block_b, E) slab


# ----------------------------------------------------------------------------
# Plain-JAX glue: InputEncoder (embedding gather + position-weighted sum).
# ----------------------------------------------------------------------------
def encode(tokens, emb, f):
    # tokens: (..., L) int32 ; emb: (V, E) ; f: (L_max, E)
    e = emb[tokens]                              # (..., L, E)
    L = tokens.shape[-1]
    return jnp.sum(f[:L, :] * e, axis=-2)        # (..., E)


def entnet_forward(params, text, q_tok, *, block_b=None):
    hp = lax.Precision.HIGHEST
    emb, f = params["emb"], params["f"]
    s = encode(text, emb, f)                            # (B, T, E)
    q2d = encode(q_tok[:, None, :], emb, f)[:, 0, :]    # (B, E)

    B, T, E = s.shape
    M = params["h0"].shape[0]
    if block_b is None:
        block_b = B                                     # whole batch per grid step
    assert B % block_b == 0
    nb = B // block_b
    BM = block_b * M
    w = params["w"]                                     # (M, E)

    # ---- batch/time-invariant precomputes hoisted out of the kernel ---------
    # V(w) (batch & time invariant) and W(s_t) (all t in one batched matmul),
    # already broadcast to the stacked (BM, E) layout the kernel uses.
    v_term = jnp.einsum("me,oe->mo", w, params["Wv"], precision=hp)     # (M, E)
    w_term = jnp.einsum("bte,oe->bto", s, params["Ww"], precision=hp)   # (B, T, E)
    uvw = v_term[None, None] + w_term[:, :, None, :]                    # (B,T,M,E)
    uvw = (uvw.reshape(nb, block_b, T, M, E)
              .transpose(0, 2, 1, 3, 4)
              .reshape(nb, T, BM, E))

    # gate precompute:  w . s_t  for all t, as one batched matmul.
    gate_w = jnp.einsum("bte,me->btm", s, w, precision=hp)              # (B, T, M)
    gate_w = (gate_w.reshape(nb, block_b, T, M)
                    .transpose(0, 1, 3, 2)
                    .reshape(nb, BM, T))

    # raw s_t broadcast over memory slots, stacked batch-major for the gate.
    s_bc = jnp.broadcast_to(s[:, :, None, :], (B, T, M, E))
    s_bc = (s_bc.reshape(nb, block_b, T, M, E)
                .transpose(0, 2, 1, 3, 4)
                .reshape(nb, T, BM, E))

    q_bc = jnp.broadcast_to(q2d[:, None, :], (B, M, E)).reshape(nb, BM, E)
    q_blk = q2d.reshape(nb, block_b, E)

    h0 = jnp.tile(params["h0"], (block_b, 1))                           # (BM, E)

    # Pre-transpose Linear weights to (in, out) so the kernel feeds the MXU
    # directly (no in-kernel transpose).
    wu_t = params["Wu"].T
    wh_t = params["Wh"].T
    bh = params["bh"].reshape(1, E)
    alpha = params["alpha"].reshape(1)                                  # SMEM scalar

    y = pl.pallas_call(
        entnet_kernel,
        out_shape=jax.ShapeDtypeStruct((nb, block_b, E), jnp.float32),
        grid_spec=pltpu.PrefetchScalarGridSpec(
            num_scalar_prefetch=0,
            grid=(nb,),
            in_specs=[
                pl.BlockSpec(memory_space=pltpu.MemorySpace.SMEM),        # alpha
                pl.BlockSpec((1, T, BM, E), lambda i: (i, 0, 0, 0)),      # s broadcast
                pl.BlockSpec((1, BM, T), lambda i: (i, 0, 0)),            # w . s_t
                pl.BlockSpec((1, T, BM, E), lambda i: (i, 0, 0, 0)),      # V(w)+W(s_t)
                pl.BlockSpec((1, BM, E), lambda i: (i, 0, 0)),            # q broadcast
                pl.BlockSpec((1, block_b, E), lambda i: (i, 0, 0)),       # q
                pl.BlockSpec((BM, E), lambda i: (0, 0)),                  # h0 stacked
                pl.BlockSpec((E, E), lambda i: (0, 0)),                   # Wu^T
                pl.BlockSpec((E, E), lambda i: (0, 0)),                   # Wh^T
                pl.BlockSpec((1, E), lambda i: (0, 0)),                   # H bias
            ],
            out_specs=pl.BlockSpec((1, block_b, E), lambda i: (i, 0, 0)),
        ),
        compiler_params=pltpu.CompilerParams(
            dimension_semantics=("parallel",)),   # batch blocks independent (v7x 2 TCs)
    )(alpha, s_bc, gate_w, uvw, q_bc, q_blk, h0, wu_t, wh_t, bh)
    return y.reshape(B, E)


# ----------------------------------------------------------------------------
# Pure-JAX reference (same math, highest precision) for a correctness check.
# ----------------------------------------------------------------------------
def reference_forward(params, text, q_tok):
    hp = lax.Precision.HIGHEST
    emb, f = params["emb"], params["f"]
    s = encode(text, emb, f)                               # (B, T, E)
    q_enc = encode(q_tok[:, None, :], emb, f)[:, 0, :]     # (B, E)
    B, T, E = s.shape
    M = params["h0"].shape[0]
    alpha = params["alpha"][0, 0]

    h = jnp.broadcast_to(params["h0"][None], (B, M, E))
    w = params["w"][None]                                  # (1, M, E)
    V = jnp.einsum("me,oe->mo", params["w"], params["Wv"], precision=hp)

    for t in range(T):
        s_t = s[:, t, :]
        g = jax.nn.sigmoid(jnp.sum((h + w) * s_t[:, None, :],
                                   axis=-1, keepdims=True))
        U = jnp.einsum("bme,oe->bmo", h, params["Wu"], precision=hp)
        Ws = jnp.einsum("be,oe->bo", s_t, params["Ww"], precision=hp)
        cand = U + V[None] + Ws[:, None, :]
        cand = jnp.where(cand >= 0, cand, alpha * cand)
        h = h + g * cand
        h = h / jnp.sqrt(jnp.sum(h * h, axis=-1, keepdims=True))

    logits = jnp.sum(h * q_enc[:, None, :], axis=-1, keepdims=True)
    p = jax.nn.softmax(logits, axis=1)
    u = jnp.sum(p * h, axis=1)
    y = q_enc + jnp.einsum("be,oe->bo", u, params["Wh"],
                           precision=hp) + params["bh"]
    return y


# ----------------------------------------------------------------------------
def make_params(key, vocab, E, L_max, M):
    ks = jax.random.split(key, 9)

    def xavier(k, shape):
        fan_out, fan_in = shape[-2], shape[-1]
        std = (2.0 / (fan_in + fan_out)) ** 0.5
        return (std * jax.random.normal(k, shape)).astype(jnp.float32)

    return {
        "emb": (0.1 * jax.random.normal(ks[0], (vocab, E))).astype(jnp.float32),
        "f":   xavier(ks[1], (L_max, E)),
        "h0":  xavier(ks[2], (M, E)),
        "w":   xavier(ks[3], (M, E)),
        "Wu":  xavier(ks[4], (E, E)),
        "Wv":  xavier(ks[5], (E, E)),
        "Ww":  xavier(ks[6], (E, E)),
        "Wh":  xavier(ks[7], (E, E)),
        "bh":  (0.01 * jax.random.normal(ks[8], (E,))).astype(jnp.float32),
        "alpha": jnp.full((1, 1), 0.25, jnp.float32),   # nn.PReLU default
    }
    # TODO(synk): OutputModule.R (Linear E->vocab) and its PReLU are never used
    # in the reference forward pass, so they are intentionally not materialized.
    # TODO(synk): DynamicMemory.zero_state re-randomizes h each forward; here it
    # is treated as a fixed h0 parameter.


if __name__ == "__main__":
    B, T, L, E, M, VOCAB = 2, 5, 7, 32, 20, 50

    key = jax.random.PRNGKey(0)
    k_p, k_text, k_q = jax.random.split(key, 3)
    params = make_params(k_p, VOCAB, E, L, M)
    text = jax.random.randint(k_text, (B, T, L), 0, VOCAB, dtype=jnp.int32)
    q_tok = jax.random.randint(k_q, (B, L), 0, VOCAB, dtype=jnp.int32)

    y = entnet_forward(params, text, q_tok)
    jax.block_until_ready(y)

    y_ref = reference_forward(params, text, q_tok)
    np.testing.assert_allclose(np.asarray(y), np.asarray(y_ref),
                               rtol=1e-3, atol=1e-3)
    print("KERNEL_OK")
</pallas_src>

<mosaic_0001>
module attributes {stable_mosaic.version = 11 : i64} {
  func.func @entnet_kernel(%arg0: i32, %arg1: memref<1xf32, #tpu.memory_space<smem>>, %arg2: memref<1x5x40x32xf32, #tpu.memory_space<vmem>>, %arg3: memref<1x40x5xf32, #tpu.memory_space<vmem>>, %arg4: memref<1x5x40x32xf32, #tpu.memory_space<vmem>>, %arg5: memref<1x40x32xf32, #tpu.memory_space<vmem>>, %arg6: memref<1x2x32xf32, #tpu.memory_space<vmem>>, %arg7: memref<40x32xf32, #tpu.memory_space<vmem>>, %arg8: memref<32x32xf32, #tpu.memory_space<vmem>>, %arg9: memref<32x32xf32, #tpu.memory_space<vmem>>, %arg10: memref<1x32xf32, #tpu.memory_space<vmem>>, %arg11: memref<1x2x32xf32, #tpu.memory_space<vmem>>) attributes {dimension_semantics = [#tpu.dimension_semantics<parallel>], iteration_bounds = array<i64: 1>, scalar_prefetch = 0 : i64, scratch_operands = 0 : i64, tpu.core_type = #tpu.core_type<tc>, window_params = [{transform_indices = @transform_0, window_bounds = array<i64: 1>}, {transform_indices = @transform_1, window_bounds = array<i64: 1, 5, 40, 32>}, {transform_indices = @transform_2, window_bounds = array<i64: 1, 40, 5>}, {transform_indices = @transform_3, window_bounds = array<i64: 1, 5, 40, 32>}, {transform_indices = @transform_4, window_bounds = array<i64: 1, 40, 32>}, {transform_indices = @transform_5, window_bounds = array<i64: 1, 2, 32>}, {pipeline_mode = #tpu.pipeline_mode<synchronous>, transform_indices = @transform_6, window_bounds = array<i64: 40, 32>}, {pipeline_mode = #tpu.pipeline_mode<synchronous>, transform_indices = @transform_7, window_bounds = array<i64: 32, 32>}, {pipeline_mode = #tpu.pipeline_mode<synchronous>, transform_indices = @transform_8, window_bounds = array<i64: 32, 32>}, {pipeline_mode = #tpu.pipeline_mode<synchronous>, transform_indices = @transform_9, window_bounds = array<i64: 1, 32>}, {transform_indices = @transform_10, window_bounds = array<i64: 1, 2, 32>}]} {
    %c0 = arith.constant 0 : index
    %0 = memref.load %arg1[%c0] : memref<1xf32, #tpu.memory_space<smem>>
    %c0_0 = arith.constant 0 : index
    %c0_1 = arith.constant 0 : index
    %1 = vector.load %arg8[%c0_0, %c0_1] : memref<32x32xf32, #tpu.memory_space<vmem>>, vector<32x32xf32>
    %c0_2 = arith.constant 0 : index
    %c0_3 = arith.constant 0 : index
    %2 = vector.load %arg7[%c0_2, %c0_3] : memref<40x32xf32, #tpu.memory_space<vmem>>, vector<40x32xf32>
    %c0_4 = arith.constant 0 : index
    %c0_5 = arith.constant 0 : index
    %c0_6 = arith.constant 0 : index
    %3 = vector.load %arg3[%c0_4, %c0_5, %c0_6] : memref<1x40x5xf32, #tpu.memory_space<vmem>>, vector<1x40x5xf32>
    %4 = vector.shape_cast %3 : vector<1x40x5xf32> to vector<40x5xf32>
    %c0_7 = arith.constant 0 : index
    %c0_8 = arith.constant 0 : index
    %c0_9 = arith.constant 0 : index
    %c0_10 = arith.constant 0 : index
    %5 = vector.load %arg2[%c0_7, %c0_8, %c0_9, %c0_10] : memref<1x5x40x32xf32, #tpu.memory_space<vmem>>, vector<1x1x40x32xf32>
    %6 = vector.shape_cast %5 : vector<1x1x40x32xf32> to vector<40x32xf32>
    %7 = arith.mulf %2, %6 : vector<40x32xf32>
    %cst = arith.constant dense<0.000000e+00> : vector<40xf32>
    %8 = vector.multi_reduction <add>, %7, %cst [1] : vector<40x32xf32> to vector<40xf32>
    %9 = vector.shape_cast %8 : vector<40xf32> to vector<40x1xf32>
    %10 = vector.extract_strided_slice %4 {offsets = [0, 0], sizes = [40, 1], strides = [1, 1]} : vector<40x5xf32> to vector<40x1xf32>
    %11 = arith.addf %9, %10 : vector<40x1xf32>
    %12 = arith.negf %11 : vector<40x1xf32>
    %13 = math.exp %12 : vector<40x1xf32>
    %cst_11 = arith.constant 1.000000e+00 : f32
    %14 = vector.broadcast %cst_11 : f32 to vector<40x1xf32>
    %15 = arith.addf %14, %13 : vector<40x1xf32>
    %16 = arith.divf %14, %15 : vector<40x1xf32>
    %cst_12 = arith.constant dense<0.000000e+00> : vector<40x32xf32>
    %17 = tpu.matmul %2, %1, %cst_12 {dimension_numbers = #tpu.dot_dimension_numbers<[1], [0], [0], [1], [0, 0, 1, 1], [], []>} : vector<40x32xf32>, vector<32x32xf32>, vector<40x32xf32> -> vector<40x32xf32>
    %c0_13 = arith.constant 0 : index
    %c0_14 = arith.constant 0 : index
    %c0_15 = arith.constant 0 : index
    %c0_16 = arith.constant 0 : index
    %18 = vector.load %arg4[%c0_13, %c0_14, %c0_15, %c0_16] : memref<1x5x40x32xf32, #tpu.memory_space<vmem>>, vector<1x1x40x32xf32>
    %19 = vector.shape_cast %18 : vector<1x1x40x32xf32> to vector<40x32xf32>
    %20 = arith.addf %17, %19 : vector<40x32xf32>
    %cst_17 = arith.constant 0.000000e+00 : f32
    %21 = vector.broadcast %cst_17 : f32 to vector<40x32xf32>
    %22 = arith.cmpf oge, %20, %21 : vector<40x32xf32>
    %23 = vector.broadcast %0 : f32 to vector<40x32xf32>
    %24 = arith.mulf %23, %20 : vector<40x32xf32>
    %25 = arith.select %22, %20, %24 : vector<40x32xi1>, vector<40x32xf32>
    %26 = vector.broadcast %16 : vector<40x1xf32> to vector<40x32xf32>
    %27 = arith.mulf %26, %25 : vector<40x32xf32>
    %28 = arith.addf %2, %27 : vector<40x32xf32>
    %29 = arith.mulf %28, %28 : vector<40x32xf32>
    %cst_18 = arith.constant dense<0.000000e+00> : vector<40xf32>
    %30 = vector.multi_reduction <add>, %29, %cst_18 [1] : vector<40x32xf32> to vector<40xf32>
    %31 = vector.shape_cast %30 : vector<40xf32> to vector<40x1xf32>
    %32 = math.rsqrt %31 : vector<40x1xf32>
    %33 = vector.broadcast %32 : vector<40x1xf32> to vector<40x32xf32>
    %34 = arith.mulf %28, %33 : vector<40x32xf32>
    %c0_19 = arith.constant 0 : index
    %c1 = arith.constant 1 : index
    %c0_20 = arith.constant 0 : index
    %c0_21 = arith.constant 0 : index
    %35 = vector.load %arg2[%c0_19, %c1, %c0_20, %c0_21] : memref<1x5x40x32xf32, #tpu.memory_space<vmem>>, vector<1x1x40x32xf32>
    %36 = vector.shape_cast %35 : vector<1x1x40x32xf32> to vector<40x32xf32>
    %37 = arith.mulf %34, %36 : vector<40x32xf32>
    %cst_22 = arith.constant dense<0.000000e+00> : vector<40xf32>
    %38 = vector.multi_reduction <add>, %37, %cst_22 [1] : vector<40x32xf32> to vector<40xf32>
    %39 = vector.shape_cast %38 : vector<40xf32> to vector<40x1xf32>
    %40 = vector.extract_strided_slice %4 {offsets = [0, 1], sizes = [40, 1], strides = [1, 1]} : vector<40x5xf32> to vector<40x1xf32>
    %41 = arith.addf %39, %40 : vector<40x1xf32>
    %42 = arith.negf %41 : vector<40x1xf32>
    %43 = math.exp %42 : vector<40x1xf32>
    %cst_23 = arith.constant 1.000000e+00 : f32
    %44 = vector.broadcast %cst_23 : f32 to vector<40x1xf32>
    %45 = arith.addf %44, %43 : vector<40x1xf32>
    %46 = arith.divf %44, %45 : vector<40x1xf32>
    %cst_24 = arith.constant dense<0.000000e+00> : vector<40x32xf32>
    %47 = tpu.matmul %34, %1, %cst_24 {dimension_numbers = #tpu.dot_dimension_numbers<[1], [0], [0], [1], [0, 0, 1, 1], [], []>} : vector<40x32xf32>, vector<32x32xf32>, vector<40x32xf32> -> vector<40x32xf32>
    %c0_25 = arith.constant 0 : index
    %c1_26 = arith.constant 1 : index
    %c0_27 = arith.constant 0 : index
    %c0_28 = arith.constant 0 : index
    %48 = vector.load %arg4[%c0_25, %c1_26, %c0_27, %c0_28] : memref<1x5x40x32xf32, #tpu.memory_space<vmem>>, vector<1x1x40x32xf32>
    %49 = vector.shape_cast %48 : vector<1x1x40x32xf32> to vector<40x32xf32>
    %50 = arith.addf %47, %49 : vector<40x32xf32>
    %cst_29 = arith.constant 0.000000e+00 : f32
    %51 = vector.broadcast %cst_29 : f32 to vector<40x32xf32>
    %52 = arith.cmpf oge, %50, %51 : vector<40x32xf32>
    %53 = vector.broadcast %0 : f32 to vector<40x32xf32>
    %54 = arith.mulf %53, %50 : vector<40x32xf32>
    %55 = arith.select %52, %50, %54 : vector<40x32xi1>, vector<40x32xf32>
    %56 = vector.broadcast %46 : vector<40x1xf32> to vector<40x32xf32>
    %57 = arith.mulf %56, %55 : vector<40x32xf32>
    %58 = arith.addf %34, %57 : vector<40x32xf32>
    %59 = arith.mulf %58, %58 : vector<40x32xf32>
    %cst_30 = arith.constant dense<0.000000e+00> : vector<40xf32>
    %60 = vector.multi_reduction <add>, %59, %cst_30 [1] : vector<40x32xf32> to vector<40xf32>
    %61 = vector.shape_cast %60 : vector<40xf32> to vector<40x1xf32>
    %62 = math.rsqrt %61 : vector<40x1xf32>
    %63 = vector.broadcast %62 : vector<40x1xf32> to vector<40x32xf32>
    %64 = arith.mulf %58, %63 : vector<40x32xf32>
    %c0_31 = arith.constant 0 : index
    %c2 = arith.constant 2 : index
    %c0_32 = arith.constant 0 : index
    %c0_33 = arith.constant 0 : index
    %65 = vector.load %arg2[%c0_31, %c2, %c0_32, %c0_33] : memref<1x5x40x32xf32, #tpu.memory_space<vmem>>, vector<1x1x40x32xf32>
    %66 = vector.shape_cast %65 : vector<1x1x40x32xf32> to vector<40x32xf32>
    %67 = arith.mulf %64, %66 : vector<40x32xf32>
    %cst_34 = arith.constant dense<0.000000e+00> : vector<40xf32>
    %68 = vector.multi_reduction <add>, %67, %cst_34 [1] : vector<40x32xf32> to vector<40xf32>
    %69 = vector.shape_cast %68 : vector<40xf32> to vector<40x1xf32>
    %70 = vector.extract_strided_slice %4 {offsets = [0, 2], sizes = [40, 1], strides = [1, 1]} : vector<40x5xf32> to vector<40x1xf32>
    %71 = arith.addf %69, %70 : vector<40x1xf32>
    %72 = arith.negf %71 : vector<40x1xf32>
    %73 = math.exp %72 : vector<40x1xf32>
    %cst_35 = arith.constant 1.000000e+00 : f32
    %74 = vector.broadcast %cst_35 : f32 to vector<40x1xf32>
    %75 = arith.addf %74, %73 : vector<40x1xf32>
    %76 = arith.divf %74, %75 : vector<40x1xf32>
    %cst_36 = arith.constant dense<0.000000e+00> : vector<40x32xf32>
    %77 = tpu.matmul %64, %1, %cst_36 {dimension_numbers = #tpu.dot_dimension_numbers<[1], [0], [0], [1], [0, 0, 1, 1], [], []>} : vector<40x32xf32>, vector<32x32xf32>, vector<40x32xf32> -> vector<40x32xf32>
    %c0_37 = arith.constant 0 : index
    %c2_38 = arith.constant 2 : index
    %c0_39 = arith.constant 0 : index
    %c0_40 = arith.constant 0 : index
    %78 = vector.load %arg4[%c0_37, %c2_38, %c0_39, %c0_40] : memref<1x5x40x32xf32, #tpu.memory_space<vmem>>, vector<1x1x40x32xf32>
    %79 = vector.shape_cast %78 : vector<1x1x40x32xf32> to vector<40x32xf32>
    %80 = arith.addf %77, %79 : vector<40x32xf32>
    %cst_41 = arith.constant 0.000000e+00 : f32
    %81 = vector.broadcast %cst_41 : f32 to vector<40x32xf32>
    %82 = arith.cmpf oge, %80, %81 : vector<40x32xf32>
    %83 = vector.broadcast %0 : f32 to vector<40x32xf32>
    %84 = arith.mulf %83, %80 : vector<40x32xf32>
    %85 = arith.select %82, %80, %84 : vector<40x32xi1>, vector<40x32xf32>
    %86 = vector.broadcast %76 : vector<40x1xf32> to vector<40x32xf32>
    %87 = arith.mulf %86, %85 : vector<40x32xf32>
    %88 = arith.addf %64, %87 : vector<40x32xf32>
    %89 = arith.mulf %88, %88 : vector<40x32xf32>
    %cst_42 = arith.constant dense<0.000000e+00> : vector<40xf32>
    %90 = vector.multi_reduction <add>, %89, %cst_42 [1] : vector<40x32xf32> to vector<40xf32>
    %91 = vector.shape_cast %90 : vector<40xf32> to vector<40x1xf32>
    %92 = math.rsqrt %91 : vector<40x1xf32>
    %93 = vector.broadcast %92 : vector<40x1xf32> to vector<40x32xf32>
    %94 = arith.mulf %88, %93 : vector<40x32xf32>
    %c0_43 = arith.constant 0 : index
    %c3 = arith.constant 3 : index
    %c0_44 = arith.constant 0 : index
    %c0_45 = arith.constant 0 : index
    %95 = vector.load %arg2[%c0_43, %c3, %c0_44, %c0_45] : memref<1x5x40x32xf32, #tpu.memory_space<vmem>>, vector<1x1x40x32xf32>
    %96 = vector.shape_cast %95 : vector<1x1x40x32xf32> to vector<40x32xf32>
    %97 = arith.mulf %94, %96 : vector<40x32xf32>
    %cst_46 = arith.constant dense<0.000000e+00> : vector<40xf32>
    %98 = vector.multi_reduction <add>, %97, %cst_46 [1] : vector<40x32xf32> to vector<40xf32>
    %99 = vector.shape_cast %98 : vector<40xf32> to vector<40x1xf32>
    %100 = vector.extract_strided_slice %4 {offsets = [0, 3], sizes = [40, 1], strides = [1, 1]} : vector<40x5xf32> to vector<40x1xf32>
    %101 = arith.addf %99, %100 : vector<40x1xf32>
    %102 = arith.negf %101 : vector<40x1xf32>
    %103 = math.exp %102 : vector<40x1xf32>
    %cst_47 = arith.constant 1.000000e+00 : f32
    %104 = vector.broadcast %cst_47 : f32 to vector<40x1xf32>
    %105 = arith.addf %104, %103 : vector<40x1xf32>
    %106 = arith.divf %104, %105 : vector<40x1xf32>
    %cst_48 = arith.constant dense<0.000000e+00> : vector<40x32xf32>
    %107 = tpu.matmul %94, %1, %cst_48 {dimension_numbers = #tpu.dot_dimension_numbers<[1], [0], [0], [1], [0, 0, 1, 1], [], []>} : vector<40x32xf32>, vector<32x32xf32>, vector<40x32xf32> -> vector<40x32xf32>
    %c0_49 = arith.constant 0 : index
    %c3_50 = arith.constant 3 : index
    %c0_51 = arith.constant 0 : index
    %c0_52 = arith.constant 0 : index
    %108 = vector.load %arg4[%c0_49, %c3_50, %c0_51, %c0_52] : memref<1x5x40x32xf32, #tpu.memory_space<vmem>>, vector<1x1x40x32xf32>
    %109 = vector.shape_cast %108 : vector<1x1x40x32xf32> to vector<40x32xf32>
    %110 = arith.addf %107, %109 : vector<40x32xf32>
    %cst_53 = arith.constant 0.000000e+00 : f32
    %111 = vector.broadcast %cst_53 : f32 to vector<40x32xf32>
    %112 = arith.cmpf oge, %110, %111 : vector<40x32xf32>
    %113 = vector.broadcast %0 : f32 to vector<40x32xf32>
    %114 = arith.mulf %113, %110 : vector<40x32xf32>
    %115 = arith.select %112, %110, %114 : vector<40x32xi1>, vector<40x32xf32>
    %116 = vector.broadcast %106 : vector<40x1xf32> to vector<40x32xf32>
    %117 = arith.mulf %116, %115 : vector<40x32xf32>
    %118 = arith.addf %94, %117 : vector<40x32xf32>
    %119 = arith.mulf %118, %118 : vector<40x32xf32>
    %cst_54 = arith.constant dense<0.000000e+00> : vector<40xf32>
    %120 = vector.multi_reduction <add>, %119, %cst_54 [1] : vector<40x32xf32> to vector<40xf32>
    %121 = vector.shape_cast %120 : vector<40xf32> to vector<40x1xf32>
    %122 = math.rsqrt %121 : vector<40x1xf32>
    %123 = vector.broadcast %122 : vector<40x1xf32> to vector<40x32xf32>
    %124 = arith.mulf %118, %123 : vector<40x32xf32>
    %c0_55 = arith.constant 0 : index
    %c4 = arith.constant 4 : index
    %c0_56 = arith.constant 0 : index
    %c0_57 = arith.constant 0 : index
    %125 = vector.load %arg2[%c0_55, %c4, %c0_56, %c0_57] : memref<1x5x40x32xf32, #tpu.memory_space<vmem>>, vector<1x1x40x32xf32>
    %126 = vector.shape_cast %125 : vector<1x1x40x32xf32> to vector<40x32xf32>
    %127 = arith.mulf %124, %126 : vector<40x32xf32>
    %cst_58 = arith.constant dense<0.000000e+00> : vector<40xf32>
    %128 = vector.multi_reduction <add>, %127, %cst_58 [1] : vector<40x32xf32> to vector<40xf32>
    %129 = vector.shape_cast %128 : vector<40xf32> to vector<40x1xf32>
    %130 = vector.extract_strided_slice %4 {offsets = [0, 4], sizes = [40, 1], strides = [1, 1]} : vector<40x5xf32> to vector<40x1xf32>
    %131 = arith.addf %129, %130 : vector<40x1xf32>
    %132 = arith.negf %131 : vector<40x1xf32>
    %133 = math.exp %132 : vector<40x1xf32>
    %cst_59 = arith.constant 1.000000e+00 : f32
    %134 = vector.broadcast %cst_59 : f32 to vector<40x1xf32>
    %135 = arith.addf %134, %133 : vector<40x1xf32>
    %136 = arith.divf %134, %135 : vector<40x1xf32>
    %cst_60 = arith.constant dense<0.000000e+00> : vector<40x32xf32>
    %137 = tpu.matmul %124, %1, %cst_60 {dimension_numbers = #tpu.dot_dimension_numbers<[1], [0], [0], [1], [0, 0, 1, 1], [], []>} : vector<40x32xf32>, vector<32x32xf32>, vector<40x32xf32> -> vector<40x32xf32>
    %c0_61 = arith.constant 0 : index
    %c4_62 = arith.constant 4 : index
    %c0_63 = arith.constant 0 : index
    %c0_64 = arith.constant 0 : index
    %138 = vector.load %arg4[%c0_61, %c4_62, %c0_63, %c0_64] : memref<1x5x40x32xf32, #tpu.memory_space<vmem>>, vector<1x1x40x32xf32>
    %139 = vector.shape_cast %138 : vector<1x1x40x32xf32> to vector<40x32xf32>
    %140 = arith.addf %137, %139 : vector<40x32xf32>
    %cst_65 = arith.constant 0.000000e+00 : f32
    %141 = vector.broadcast %cst_65 : f32 to vector<40x32xf32>
    %142 = arith.cmpf oge, %140, %141 : vector<40x32xf32>
    %143 = vector.broadcast %0 : f32 to vector<40x32xf32>
    %144 = arith.mulf %143, %140 : vector<40x32xf32>
    %145 = arith.select %142, %140, %144 : vector<40x32xi1>, vector<40x32xf32>
    %146 = vector.broadcast %136 : vector<40x1xf32> to vector<40x32xf32>
    %147 = arith.mulf %146, %145 : vector<40x32xf32>
    %148 = arith.addf %124, %147 : vector<40x32xf32>
    %149 = arith.mulf %148, %148 : vector<40x32xf32>
    %cst_66 = arith.constant dense<0.000000e+00> : vector<40xf32>
    %150 = vector.multi_reduction <add>, %149, %cst_66 [1] : vector<40x32xf32> to vector<40xf32>
    %151 = vector.shape_cast %150 : vector<40xf32> to vector<40x1xf32>
    %152 = math.rsqrt %151 : vector<40x1xf32>
    %153 = vector.broadcast %152 : vector<40x1xf32> to vector<40x32xf32>
    %154 = arith.mulf %148, %153 : vector<40x32xf32>
    %c0_67 = arith.constant 0 : index
    %c0_68 = arith.constant 0 : index
    %c0_69 = arith.constant 0 : index
    %155 = vector.load %arg5[%c0_67, %c0_68, %c0_69] : memref<1x40x32xf32, #tpu.memory_space<vmem>>, vector<1x40x32xf32>
    %156 = vector.shape_cast %155 : vector<1x40x32xf32> to vector<40x32xf32>
    %157 = arith.mulf %154, %156 : vector<40x32xf32>
    %cst_70 = arith.constant dense<0.000000e+00> : vector<40xf32>
    %158 = vector.multi_reduction <add>, %157, %cst_70 [1] : vector<40x32xf32> to vector<40xf32>
    %159 = vector.shape_cast %158 : vector<40xf32> to vector<40x1xf32>
    %160 = vector.extract_strided_slice %154 {offsets = [0, 0], sizes = [20, 32], strides = [1, 1]} : vector<40x32xf32> to vector<20x32xf32>
    %161 = vector.extract_strided_slice %159 {offsets = [0, 0], sizes = [20, 1], strides = [1, 1]} : vector<40x1xf32> to vector<20x1xf32>
    %cst_71 = arith.constant dense<0xFF800000> : vector<1xf32>
    %162 = vector.multi_reduction <maximumf>, %161, %cst_71 [0] : vector<20x1xf32> to vector<1xf32>
    %163 = vector.shape_cast %162 : vector<1xf32> to vector<1x1xf32>
    %164 = vector.broadcast %163 : vector<1x1xf32> to vector<20x1xf32>
    %165 = arith.subf %161, %164 : vector<20x1xf32>
    %166 = math.exp %165 : vector<20x1xf32>
    %cst_72 = arith.constant dense<0.000000e+00> : vector<1xf32>
    %167 = vector.multi_reduction <add>, %166, %cst_72 [0] : vector<20x1xf32> to vector<1xf32>
    %168 = vector.shape_cast %167 : vector<1xf32> to vector<1x1xf32>
    %169 = vector.broadcast %168 : vector<1x1xf32> to vector<20x1xf32>
    %170 = arith.divf %166, %169 : vector<20x1xf32>
    %171 = vector.broadcast %170 : vector<20x1xf32> to vector<20x32xf32>
    %172 = arith.mulf %171, %160 : vector<20x32xf32>
    %cst_73 = arith.constant dense<0.000000e+00> : vector<32xf32>
    %173 = vector.multi_reduction <add>, %172, %cst_73 [0] : vector<20x32xf32> to vector<32xf32>
    %174 = vector.shape_cast %173 : vector<32xf32> to vector<1x32xf32>
    %175 = vector.extract_strided_slice %154 {offsets = [20, 0], sizes = [20, 32], strides = [1, 1]} : vector<40x32xf32> to vector<20x32xf32>
    %176 = vector.extract_strided_slice %159 {offsets = [20, 0], sizes = [20, 1], strides = [1, 1]} : vector<40x1xf32> to vector<20x1xf32>
    %cst_74 = arith.constant dense<0xFF800000> : vector<1xf32>
    %177 = vector.multi_reduction <maximumf>, %176, %cst_74 [0] : vector<20x1xf32> to vector<1xf32>
    %178 = vector.shape_cast %177 : vector<1xf32> to vector<1x1xf32>
    %179 = vector.broadcast %178 : vector<1x1xf32> to vector<20x1xf32>
    %180 = arith.subf %176, %179 : vector<20x1xf32>
    %181 = math.exp %180 : vector<20x1xf32>
    %cst_75 = arith.constant dense<0.000000e+00> : vector<1xf32>
    %182 = vector.multi_reduction <add>, %181, %cst_75 [0] : vector<20x1xf32> to vector<1xf32>
    %183 = vector.shape_cast %182 : vector<1xf32> to vector<1x1xf32>
    %184 = vector.broadcast %183 : vector<1x1xf32> to vector<20x1xf32>
    %185 = arith.divf %181, %184 : vector<20x1xf32>
    %186 = vector.broadcast %185 : vector<20x1xf32> to vector<20x32xf32>
    %187 = arith.mulf %186, %175 : vector<20x32xf32>
    %cst_76 = arith.constant dense<0.000000e+00> : vector<32xf32>
    %188 = vector.multi_reduction <add>, %187, %cst_76 [0] : vector<20x32xf32> to vector<32xf32>
    %189 = vector.shape_cast %188 : vector<32xf32> to vector<1x32xf32>
    %190 = tpu.concatenate %174, %189 in 0 : vector<1x32xf32>, vector<1x32xf32> -> vector<2x32xf32>
    %c0_77 = arith.constant 0 : index
    %c0_78 = arith.constant 0 : index
    %c0_79 = arith.constant 0 : index
    %191 = vector.load %arg6[%c0_77, %c0_78, %c0_79] : memref<1x2x32xf32, #tpu.memory_space<vmem>>, vector<1x2x32xf32>
    %192 = vector.shape_cast %191 : vector<1x2x32xf32> to vector<2x32xf32>
    %c0_80 = arith.constant 0 : index
    %c0_81 = arith.constant 0 : index
    %193 = vector.load %arg9[%c0_80, %c0_81] : memref<32x32xf32, #tpu.memory_space<vmem>>, vector<32x32xf32>
    %cst_82 = arith.constant dense<0.000000e+00> : vector<2x32xf32>
    %194 = tpu.matmul %190, %193, %cst_82 {dimension_numbers = #tpu.dot_dimension_numbers<[1], [0], [0], [1], [0, 0, 1, 1], [], []>} : vector<2x32xf32>, vector<32x32xf32>, vector<2x32xf32> -> vector<2x32xf32>
    %195 = arith.addf %192, %194 : vector<2x32xf32>
    %c0_83 = arith.constant 0 : index
    %c0_84 = arith.constant 0 : index
    %196 = vector.load %arg10[%c0_83, %c0_84] : memref<1x32xf32, #tpu.memory_space<vmem>>, vector<1x32xf32>
    %197 = vector.broadcast %196 : vector<1x32xf32> to vector<2x32xf32>
    %198 = arith.addf %195, %197 : vector<2x32xf32>
    %c0_85 = arith.constant 0 : index
    %c0_86 = arith.constant 0 : index
    %c0_87 = arith.constant 0 : index
    %199 = vector.load %arg11[%c0_85, %c0_86, %c0_87] : memref<1x2x32xf32, #tpu.memory_space<vmem>>, vector<1x2x32xf32>
    %200 = vector.shape_cast %199 : vector<1x2x32xf32> to vector<2x32xf32>
    %201 = vector.shape_cast %198 : vector<2x32xf32> to vector<1x2x32xf32>
    tpu.vector_store %arg11[%c0_85, %c0_86, %c0_87], %201 {strides = array<i32>} : memref<1x2x32xf32, #tpu.memory_space<vmem>>, vector<1x2x32xf32>,
    return
  }
  func.func @transform_0(%arg0: i32) -> i32 {
    %c0_i32 = arith.constant 0 : i32
    %c0_i32_0 = arith.constant 0 : i32
    return %c0_i32 : i32
  }
  func.func @transform_1(%arg0: i32) -> (i32, i32, i32, i32) {
    %c0_i32 = arith.constant 0 : i32
    %c0_i32_0 = arith.constant 0 : i32
    %c0_i32_1 = arith.constant 0 : i32
    %c0_i32_2 = arith.constant 0 : i32
    return %arg0, %c0_i32, %c0_i32_0, %c0_i32_1 : i32, i32, i32, i32
  }
  func.func @transform_2(%arg0: i32) -> (i32, i32, i32) {
    %c0_i32 = arith.constant 0 : i32
    %c0_i32_0 = arith.constant 0 : i32
    %c0_i32_1 = arith.constant 0 : i32
    return %arg0, %c0_i32, %c0_i32_0 : i32, i32, i32
  }
  func.func @transform_3(%arg0: i32) -> (i32, i32, i32, i32) {
    %c0_i32 = arith.constant 0 : i32
    %c0_i32_0 = arith.constant 0 : i32
    %c0_i32_1 = arith.constant 0 : i32
    %c0_i32_2 = arith.constant 0 : i32
    return %arg0, %c0_i32, %c0_i32_0, %c0_i32_1 : i32, i32, i32, i32
  }
  func.func @transform_4(%arg0: i32) -> (i32, i32, i32) {
    %c0_i32 = arith.constant 0 : i32
    %c0_i32_0 = arith.constant 0 : i32
    %c0_i32_1 = arith.constant 0 : i32
    return %arg0, %c0_i32, %c0_i32_0 : i32, i32, i32
  }
  func.func @transform_5(%arg0: i32) -> (i32, i32, i32) {
    %c0_i32 = arith.constant 0 : i32
    %c0_i32_0 = arith.constant 0 : i32
    %c0_i32_1 = arith.constant 0 : i32
    return %arg0, %c0_i32, %c0_i32_0 : i32, i32, i32
  }
  func.func @transform_6(%arg0: i32) -> (i32, i32) {
    %c0_i32 = arith.constant 0 : i32
    %c0_i32_0 = arith.constant 0 : i32
    %c0_i32_1 = arith.constant 0 : i32
    return %c0_i32, %c0_i32_0 : i32, i32
  }
  func.func @transform_7(%arg0: i32) -> (i32, i32) {
    %c0_i32 = arith.constant 0 : i32
    %c0_i32_0 = arith.constant 0 : i32
    %c0_i32_1 = arith.constant 0 : i32
    return %c0_i32, %c0_i32_0 : i32, i32
  }
  func.func @transform_8(%arg0: i32) -> (i32, i32) {
    %c0_i32 = arith.constant 0 : i32
    %c0_i32_0 = arith.constant 0 : i32
    %c0_i32_1 = arith.constant 0 : i32
    return %c0_i32, %c0_i32_0 : i32, i32
  }
  func.func @transform_9(%arg0: i32) -> (i32, i32) {
    %c0_i32 = arith.constant 0 : i32
    %c0_i32_0 = arith.constant 0 : i32
    %c0_i32_1 = arith.constant 0 : i32
    return %c0_i32, %c0_i32_0 : i32, i32
  }
  func.func @transform_10(%arg0: i32) -> (i32, i32, i32) {
    %c0_i32 = arith.constant 0 : i32
    %c0_i32_0 = arith.constant 0 : i32
    %c0_i32_1 = arith.constant 0 : i32
    return %arg0, %c0_i32, %c0_i32_0 : i32, i32, i32
  }
}

</mosaic_0001>

<llo_original>
// kernel: tpu_custom_call.1
$region0: #{tpu_custom_call.1}
  #allocation0 [shape = 'u32[]', space=smem, size = 0x4, offset = 0x4, fixed_abs, tag = 'smem constant byte address 0x4 - core index']
  #allocation1 [shape = 'u32[72,128]{1,0:T(1,128)}', space=vmem, size = 0x9000, scoped, tag = 'internal scratch']
  #allocation2 [shape = 'f32[1]{0:T(128)S(6)}', space=smem, size = 0x200, scoped, tag = 'scoped memory for tpu_custom_call.1']
  %s0 = inlined_call_operand.<no memory space> [shape: f32[1], index: 0, kind: input, shape index: {}]
  %s1 = inlined_call_operand.vmem [shape: f32[1,5,40,32], index: 1, kind: input, shape index: {}]
  %s2 = inlined_call_operand.vmem [shape: f32[1,40,5], index: 2, kind: input, shape index: {}]
  %s3 = inlined_call_operand.vmem [shape: f32[1,5,40,32], index: 3, kind: input, shape index: {}]
  %s4 = inlined_call_operand.vmem [shape: f32[1,40,32], index: 4, kind: input, shape index: {}]
  %s5 = inlined_call_operand.vmem [shape: f32[1,2,32], index: 5, kind: input, shape index: {}]
  %s6 = inlined_call_operand.vmem [shape: f32[40,32], index: 6, kind: input, shape index: {}]
  %s7 = inlined_call_operand.vmem [shape: f32[32,32], index: 7, kind: input, shape index: {}]
  %s8 = inlined_call_operand.vmem [shape: f32[32,32], index: 8, kind: input, shape index: {}]
  %s9 = inlined_call_operand.vmem [shape: f32[1,32], index: 9, kind: input, shape index: {}]
  %s10 = inlined_call_operand.hbm [shape: f32[1,2,32], index: 10, kind: output, shape index: {}]
  %s11 = sld [smem:[#allocation0]]
  $region50: #{tpu_custom_call.1} parent=0
    _
  %s13 = ssub.s32 1, %s11
  %s14 = scalar_select 0, %s13, %s11
  %15 = sst [smem:[#allocation2]] %s0
  $region1: #{tpu_custom_call.1} parent=0
    #allocation3 [shape = 'u8[1024]{0}', space=vmem, size = 0x400, scoped, tag = 'output window, operand 0, single buffered']
    #allocation4 [shape = 's32[1]{0}', space=sflag, size = 0x4, scoped, tag = 'scoped memory for tpu_custom_call.1']
    %16 = vsyncpa [#allocation4], 0
    // Predicated region
    $region2: #{tpu_custom_call.1} parent=1 // pred_check
      _
    $region3: #{tpu_custom_call.1} parent=1 // pred_check_branch
      %18 = sbr.rel (0) target = $region5
    $region4: #{tpu_custom_call.1} parent=1 // pred_region
      _
    $region5: #{tpu_custom_call.1} parent=1 // pred_fallthru
      _
    // Predicated region
    $region6: #{tpu_custom_call.1} parent=1 // pred_check
      _
    $region7: #{tpu_custom_call.1} parent=1 // pred_check_branch
      %20 = sbr.rel (0) target = $region9
    $region8: #{tpu_custom_call.1} parent=1 // pred_region
      _
    $region9: #{tpu_custom_call.1} parent=1 // pred_fallthru
      _
    // Predicated region
    $region10: #{tpu_custom_call.1} parent=1 // pred_check
      _
    $region11: #{tpu_custom_call.1} parent=1 // pred_check_branch
      %22 = sbr.rel (0) target = $region13
    $region12: #{tpu_custom_call.1} parent=1 // pred_region
      _
    $region13: #{tpu_custom_call.1} parent=1 // pred_fallthru
      _
    // Predicated region
    $region14: #{tpu_custom_call.1} parent=1 // pred_check
      _
    $region15: #{tpu_custom_call.1} parent=1 // pred_check_branch
      %24 = sbr.rel (0) target = $region17
    $region16: #{tpu_custom_call.1} parent=1 // pred_region
      _
    $region17: #{tpu_custom_call.1} parent=1 // pred_fallthru
      _
    // Predicated region
    $region18: #{tpu_custom_call.1} parent=1 // pred_check
      _
    $region19: #{tpu_custom_call.1} parent=1 // pred_check_branch
      %26 = sbr.rel (0) target = $region21
    $region20: #{tpu_custom_call.1} parent=1 // pred_region
      _
    $region21: #{tpu_custom_call.1} parent=1 // pred_fallthru
      _
    // Predicated region
    $region22: #{tpu_custom_call.1} parent=1 // pred_check
      _
    $region23: #{tpu_custom_call.1} parent=1 // pred_check_branch
      %28 = sbr.rel (0) target = $region25
    $region24: #{tpu_custom_call.1} parent=1 // pred_region
      _
    $region25: #{tpu_custom_call.1} parent=1 // pred_fallthru
      _
    // Predicated region
    $region26: #{tpu_custom_call.1} parent=1 // pred_check
      _
    $region27: #{tpu_custom_call.1} parent=1 // pred_check_branch
      %30 = sbr.rel (0) target = $region29
    $region28: #{tpu_custom_call.1} parent=1 // pred_region
      _
    $region29: #{tpu_custom_call.1} parent=1 // pred_fallthru
      _
    // Predicated region
    $region30: #{tpu_custom_call.1} parent=1 // pred_check
      _
    $region31: #{tpu_custom_call.1} parent=1 // pred_check_branch
      %32 = sbr.rel (0) target = $region33
    $region32: #{tpu_custom_call.1} parent=1 // pred_region
      _
    $region33: #{tpu_custom_call.1} parent=1 // pred_fallthru
      _
    // Predicated region
    $region34: #{tpu_custom_call.1} parent=1 // pred_check
      _
    $region35: #{tpu_custom_call.1} parent=1 // pred_check_branch
      %34 = sbr.rel (0) target = $region37
    $region36: #{tpu_custom_call.1} parent=1 // pred_region
      _
    $region37: #{tpu_custom_call.1} parent=1 // pred_fallthru
      _
    // Predicated region
    $region38: #{tpu_custom_call.1} parent=1 // pred_check
      _
    $region39: #{tpu_custom_call.1} parent=1 // pred_check_branch
      %36 = sbr.rel (0) target = $region41
    $region40: #{tpu_custom_call.1} parent=1 // pred_region
      _
    $region41: #{tpu_custom_call.1} parent=1 // pred_fallthru
      _
    %s37 = sld [smem:[#allocation2]]
    %v38 = vld [vmem:[%s7] sm:$0xff]
    %v39 = vld [vmem:[%s7 + $0x8] sm:$0xff]
    %v40 = vld [vmem:[%s7 + $0x10] sm:$0xff]
    %v41 = vld [vmem:[%s7 + $0x18] sm:$0xff]
    %v42 = vld [vmem:[%s6] sm:$0xff]
    %v43 = vld [vmem:[%s6 + $0x8] sm:$0xff]
    %v44 = vld [vmem:[%s6 + $0x10] sm:$0xff]
    %v45 = vld [vmem:[%s6 + $0x18] sm:$0xff]
    %v46 = vld [vmem:[%s6 + $0x20] sm:$0xff]
    %v47 = vld [vmem:[%s2] sm:$0xff]
    %v48 = vld [vmem:[%s2 + $0x8] sm:$0xff]
    %v49 = vld [vmem:[%s2 + $0x10] sm:$0xff]
    %v50 = vld [vmem:[%s2 + $0x18] sm:$0xff]
    %v51 = vld [vmem:[%s2 + $0x20] sm:$0xff]
    %v52 = vld [vmem:[%s1] sm:$0xff]
    %v53 = vld [vmem:[%s1 + $0x8] sm:$0xff]
    %v54 = vld [vmem:[%s1 + $0x10] sm:$0xff]
    %v55 = vld [vmem:[%s1 + $0x18] sm:$0xff]
    %v56 = vld [vmem:[%s1 + $0x20] sm:$0xff]
    %v57 = vmul.f32 %v42, %v52
    %v58 = vmul.f32 %v43, %v53
    %v59 = vmul.f32 %v44, %v54
    %v60 = vmul.f32 %v45, %v55
    %v61 = vmul.f32 %v46, %v56
    %vm62 = vcmask 261120
    %v63 = vsel %vm62, %v57, 0.0
    %64 = vadd.xlane.f32.xlu0 %v63
    %v65 = vpop.xlane.xlu0 %64
    %v66 = vsel %vm62, %v58, 0.0
    %67 = vadd.xlane.f32.xlu0 %v66
    %v68 = vpop.xlane.xlu0 %67
    %v69 = vsel %vm62, %v59, 0.0
    %70 = vadd.xlane.f32.xlu0 %v69
    %v71 = vpop.xlane.xlu0 %70
    %v72 = vsel %vm62, %v60, 0.0
    %73 = vadd.xlane.f32.xlu0 %v72
    %v74 = vpop.xlane.xlu0 %73
    %v75 = vsel %vm62, %v61, 0.0
    %76 = vadd.xlane.f32.xlu0 %v75
    %v77 = vpop.xlane.xlu0 %76
    %v78 = vadd.f32 %v65, %v47
    %v79 = vadd.f32 %v68, %v48
    %v80 = vadd.f32 %v71, %v49
    %v81 = vadd.f32 %v74, %v50
    %v82 = vadd.f32 %v77, %v51
    %v83 = vxor.u32 %v78, 2147483648
    %v84 = vxor.u32 %v79, 2147483648
    %v85 = vxor.u32 %v80, 2147483648
    %v86 = vxor.u32 %v81, 2147483648
    %v87 = vxor.u32 %v82, 2147483648
    %v88 = vmul.f32 %v83, 1.442695
    %v89 = vpow.pop %v88
    %v90 = vmul.f32 %v84, 1.442695
    %v91 = vpow.pop %v90
    %v92 = vmul.f32 %v85, 1.442695
    %v93 = vpow.pop %v92
    %v94 = vmul.f32 %v86, 1.442695
    %v95 = vpow.pop %v94
    %v96 = vmul.f32 %v87, 1.442695
    %v97 = vpow.pop %v96
    %v98 = vadd.f32 %v89, 1.0
    %v99 = vadd.f32 %v91, 1.0
    %v100 = vadd.f32 %v93, 1.0
    %v101 = vadd.f32 %v95, 1.0
    %v102 = vadd.f32 %v97, 1.0
    %v103 = vrcp.pop %v98
    %v104 = vmul.f32 %v98, %v103
    %v105 = vsub.f32 1.0, %v104
    %v106 = vmul.f32 %v103, %v105
    %v107 = vadd.f32 %v103, %v106
    %vm108 = vweird.f32 %v98
    %vm109 = vweird.f32 %v103
    %vm110 = vmor %vm108, %vm109
    %v111 = vsel %vm110, %v103, %v107
    %v112 = vand.u32 2147483647, %v98
    %vm113 = vcmp.eq.f32.partialorder %v112, 8.507059e+37
    %v114 = vand.u32 %v98, 2147483648
    %v115 = vor.u32 1.1754944e-38, %v114
    %v116 = vsel %vm113, %v115, %v111
    %v117 = vmul.f32 1.0, %v116
    %v118 = vrcp.pop %v99
    %v119 = vmul.f32 %v99, %v118
    %v120 = vsub.f32 1.0, %v119
    %v121 = vmul.f32 %v118, %v120
    %v122 = vadd.f32 %v118, %v121
    %vm123 = vweird.f32 %v99
    %vm124 = vweird.f32 %v118
    %vm125 = vmor %vm123, %vm124
    %v126 = vsel %vm125, %v118, %v122
    %v127 = vand.u32 2147483647, %v99
    %vm128 = vcmp.eq.f32.partialorder %v127, 8.507059e+37
    %v129 = vand.u32 %v99, 2147483648
    %v130 = vor.u32 1.1754944e-38, %v129
    %v131 = vsel %vm128, %v130, %v126
    %v132 = vmul.f32 1.0, %v131
    %v133 = vrcp.pop %v100
    %v134 = vmul.f32 %v100, %v133
    %v135 = vsub.f32 1.0, %v134
    %v136 = vmul.f32 %v133, %v135
    %v137 = vadd.f32 %v133, %v136
    %vm138 = vweird.f32 %v100
    %vm139 = vweird.f32 %v133
    %vm140 = vmor %vm138, %vm139
    %v141 = vsel %vm140, %v133, %v137
    %v142 = vand.u32 2147483647, %v100
    %vm143 = vcmp.eq.f32.partialorder %v142, 8.507059e+37
    %v144 = vand.u32 %v100, 2147483648
    %v145 = vor.u32 1.1754944e-38, %v144
    %v146 = vsel %vm143, %v145, %v141
    %v147 = vmul.f32 1.0, %v146
    %v148 = vrcp.pop %v101
    %v149 = vmul.f32 %v101, %v148
    %v150 = vsub.f32 1.0, %v149
    %v151 = vmul.f32 %v148, %v150
    %v152 = vadd.f32 %v148, %v151
    %vm153 = vweird.f32 %v101
    %vm154 = vweird.f32 %v148
    %vm155 = vmor %vm153, %vm154
    %v156 = vsel %vm155, %v148, %v152
    %v157 = vand.u32 2147483647, %v101
    %vm158 = vcmp.eq.f32.partialorder %v157, 8.507059e+37
    %v159 = vand.u32 %v101, 2147483648
    %v160 = vor.u32 1.1754944e-38, %v159
    %v161 = vsel %vm158, %v160, %v156
    %v162 = vmul.f32 1.0, %v161
    %v163 = vrcp.pop %v102
    %v164 = vmul.f32 %v102, %v163
    %v165 = vsub.f32 1.0, %v164
    %v166 = vmul.f32 %v163, %v165
    %v167 = vadd.f32 %v163, %v166
    %vm168 = vweird.f32 %v102
    %vm169 = vweird.f32 %v163
    %vm170 = vmor %vm168, %vm169
    %v171 = vsel %vm170, %v163, %v167
    %v172 = vand.u32 2147483647, %v102
    %vm173 = vcmp.eq.f32.partialorder %v172, 8.507059e+37
    %v174 = vand.u32 %v102, 2147483648
    %v175 = vor.u32 1.1754944e-38, %v174
    %v176 = vsel %vm173, %v175, %v171
    %v177 = vmul.f32 1.0, %v176
    %v178 = vld [vmem:[%s3] sm:$0xff]
    %v179 = vld [vmem:[%s3 + $0x8] sm:$0xff]
    %v180 = vld [vmem:[%s3 + $0x10] sm:$0xff]
    %v181 = vld [vmem:[%s3 + $0x18] sm:$0xff]
    %v182 = vld [vmem:[%s3 + $0x20] sm:$0xff]
    %v184 = vsel %vm62, %v42, 0
    %v187 = vsel %vm62, %v43, 0
    %v190 = vsel %vm62, %v44, 0
    %v193 = vsel %vm62, %v45, 0
    %v196 = vsel %vm62, %v46, 0
    %198 = vmatpush.msra.mxu0 0.0
    %199 = vmatpush.msra.mxu0 0.0
    %200 = vmatpush.msra.mxu0 0.0
    %201 = vmatpush.msra.mxu0 0.0
    %202 = vmatpush.msra.mxu0 0.0
    %203 = vmatpush.msra.mxu0 0.0
    %204 = vmatpush.msra.mxu0 0.0
    %205 = vmatpush.msra.mxu0 0.0
    %206 = vmatpush.msra.mxu0 0.0
    %207 = vmatpush.msra.mxu0 0.0
    %208 = vmatpush.msra.mxu0 0.0
    %209 = vmatpush.msra.mxu0 0.0
    %210 = vmatpush.msra.mxu0 %v41
    %211 = vmatpush.msra.mxu0 %v40
    %212 = vmatpush.msra.mxu0 %v39
    %213 = vmatpush.msra.mxu0 %v38
    %214 = vmatmul.f32.gmra.mxu0 %v184
    %v215 = vpop.f32.mrf.mxu0
    %v216 = vadd.f32 %v178, %v215
    %217 = vmatmul.f32.gmra.mxu0 %v187
    %v218 = vpop.f32.mrf.mxu0
    %v219 = vadd.f32 %v179, %v218
    %220 = vmatmul.f32.gmra.mxu0 %v190
    %v221 = vpop.f32.mrf.mxu0
    %v222 = vadd.f32 %v180, %v221
    %223 = vmatmul.f32.gmra.mxu0 %v193
    %v224 = vpop.f32.mrf.mxu0
    %v225 = vadd.f32 %v181, %v224
    %226 = vmatmul.f32.gmra.mxu0 %v196
    %v227 = vpop.f32.mrf.mxu0
    %v228 = vadd.f32 %v182, %v227
    %229 = vdwg.mxu0
    %vm230 = vcmp.ge.f32.partialorder %v216, 0.0
    %vm231 = vcmp.ge.f32.partialorder %v219, 0.0
    %vm232 = vcmp.ge.f32.partialorder %v222, 0.0
    %vm233 = vcmp.ge.f32.partialorder %v225, 0.0
    %vm234 = vcmp.ge.f32.partialorder %v228, 0.0
    %v235 = vstv %s37
    %v236 = vmul.f32 %v235, %v216
    %v237 = vmul.f32 %v235, %v219
    %v238 = vmul.f32 %v235, %v222
    %v239 = vmul.f32 %v235, %v225
    %v240 = vmul.f32 %v235, %v228
    %v241 = vsel %vm230, %v216, %v236
    %v242 = vsel %vm231, %v219, %v237
    %v243 = vsel %vm232, %v222, %v238
    %v244 = vsel %vm233, %v225, %v239
    %v245 = vsel %vm234, %v228, %v240
    %247 = vset.pattern.permute.xlu0 0
    %248 = vperm.xlu0 %247, %v117
    %v249 = vpop.permute.xlu0 %248
    %252 = vset.pattern.permute.xlu0 0
    %253 = vperm.xlu0 %252, %v132
    %v254 = vpop.permute.xlu0 %253
    %257 = vset.pattern.permute.xlu0 0
    %258 = vperm.xlu0 %257, %v147
    %v259 = vpop.permute.xlu0 %258
    %262 = vset.pattern.permute.xlu0 0
    %263 = vperm.xlu0 %262, %v162
    %v264 = vpop.permute.xlu0 %263
    %267 = vset.pattern.permute.xlu0 0
    %268 = vperm.xlu0 %267, %v177
    %v269 = vpop.permute.xlu0 %268
    %v271 = vmul.f32 %v249, %v241
    %v272 = vmul.f32 %v254, %v242
    %v273 = vmul.f32 %v259, %v243
    %v274 = vmul.f32 %v264, %v244
    %v275 = vmul.f32 %v269, %v245
    %v276 = vadd.f32 %v42, %v271
    %v277 = vadd.f32 %v43, %v272
    %v278 = vadd.f32 %v44, %v273
    %v279 = vadd.f32 %v45, %v274
    %v280 = vadd.f32 %v46, %v275
    %v281 = vmul.f32 %v276, %v276
    %v282 = vmul.f32 %v277, %v277
    %v283 = vmul.f32 %v278, %v278
    %v284 = vmul.f32 %v279, %v279
    %v285 = vmul.f32 %v280, %v280
    %v286 = vsel %vm62, %v281, 0.0
    %287 = vadd.xlane.f32.xlu0 %v286
    %v288 = vpop.xlane.xlu0 %287
    %v289 = vsel %vm62, %v282, 0.0
    %290 = vadd.xlane.f32.xlu0 %v289
    %v291 = vpop.xlane.xlu0 %290
    %v292 = vsel %vm62, %v283, 0.0
    %293 = vadd.xlane.f32.xlu0 %v292
    %v294 = vpop.xlane.xlu0 %293
    %v295 = vsel %vm62, %v284, 0.0
    %296 = vadd.xlane.f32.xlu0 %v295
    %v297 = vpop.xlane.xlu0 %296
    %v298 = vsel %vm62, %v285, 0.0
    %299 = vadd.xlane.f32.xlu0 %v298
    %v300 = vpop.xlane.xlu0 %299
    %v301 = vrsqrt.pop %v288
    %v302 = vmul.f32 %v301, %v288
    %v303 = vmul.f32 %v302, %v301
    %v304 = vmul.f32 0.5, %v303
    %v305 = vsub.f32 1.5, %v304
    %v306 = vmul.f32 %v301, %v305
    %vm307 = vweird.f32 %v288
    %vm308 = vweird.f32 %v301
    %vm309 = vmor %vm307, %vm308
    %v310 = vsel %vm309, %v301, %v306
    %v311 = vrsqrt.pop %v291
    %v312 = vmul.f32 %v311, %v291
    %v313 = vmul.f32 %v312, %v311
    %v314 = vmul.f32 0.5, %v313
    %v315 = vsub.f32 1.5, %v314
    %v316 = vmul.f32 %v311, %v315
    %vm317 = vweird.f32 %v291
    %vm318 = vweird.f32 %v311
    %vm319 = vmor %vm317, %vm318
    %v320 = vsel %vm319, %v311, %v316
    %v321 = vrsqrt.pop %v294
    %v322 = vmul.f32 %v321, %v294
    %v323 = vmul.f32 %v322, %v321
    %v324 = vmul.f32 0.5, %v323
    %v325 = vsub.f32 1.5, %v324
    %v326 = vmul.f32 %v321, %v325
    %vm327 = vweird.f32 %v294
    %vm328 = vweird.f32 %v321
    %vm329 = vmor %vm327, %vm328
    %v330 = vsel %vm329, %v321, %v326
    %v331 = vrsqrt.pop %v297
    %v332 = vmul.f32 %v331, %v297
    %v333 = vmul.f32 %v332, %v331
    %v334 = vmul.f32 0.5, %v333
    %v335 = vsub.f32 1.5, %v334
    %v336 = vmul.f32 %v331, %v335
    %vm337 = vweird.f32 %v297
    %vm338 = vweird.f32 %v331
    %vm339 = vmor %vm337, %vm338
    %v340 = vsel %vm339, %v331, %v336
    %v341 = vrsqrt.pop %v300
    %v342 = vmul.f32 %v341, %v300
    %v343 = vmul.f32 %v342, %v341
    %v344 = vmul.f32 0.5, %v343
    %v345 = vsub.f32 1.5, %v344
    %v346 = vmul.f32 %v341, %v345
    %vm347 = vweird.f32 %v300
    %vm348 = vweird.f32 %v341
    %vm349 = vmor %vm347, %vm348
    %v350 = vsel %vm349, %v341, %v346
    %v351 = vmul.f32 %v276, %v310
    %v352 = vmul.f32 %v277, %v320
    %v353 = vmul.f32 %v278, %v330
    %v354 = vmul.f32 %v279, %v340
    %v355 = vmul.f32 %v280, %v350
    %s356 = scalar_lea.vmem %s1, 40
    %v357 = vld [vmem:[%s356] sm:$0xff]
    %v358 = vld [vmem:[%s356 + $0x8] sm:$0xff]
    %v359 = vld [vmem:[%s356 + $0x10] sm:$0xff]
    %v360 = vld [vmem:[%s356 + $0x18] sm:$0xff]
    %v361 = vld [vmem:[%s356 + $0x20] sm:$0xff]
    %v362 = vmul.f32 %v351, %v357
    %v363 = vmul.f32 %v352, %v358
    %v364 = vmul.f32 %v353, %v359
    %v365 = vmul.f32 %v354, %v360
    %v366 = vmul.f32 %v355, %v361
    %v367 = vsel %vm62, %v362, 0.0
    %368 = vadd.xlane.f32.xlu0 %v367
    %v369 = vpop.xlane.xlu0 %368
    %v370 = vsel %vm62, %v363, 0.0
    %371 = vadd.xlane.f32.xlu0 %v370
    %v372 = vpop.xlane.xlu0 %371
    %v373 = vsel %vm62, %v364, 0.0
    %374 = vadd.xlane.f32.xlu0 %v373
    %v375 = vpop.xlane.xlu0 %374
    %v376 = vsel %vm62, %v365, 0.0
    %377 = vadd.xlane.f32.xlu0 %v376
    %v378 = vpop.xlane.xlu0 %377
    %v379 = vsel %vm62, %v366, 0.0
    %380 = vadd.xlane.f32.xlu0 %v379
    %v381 = vpop.xlane.xlu0 %380
    %v382 = vadd.f32 %v369, %v47
    %v383 = vadd.f32 %v372, %v48
    %v384 = vadd.f32 %v375, %v49
    %v385 = vadd.f32 %v378, %v50
    %v386 = vadd.f32 %v381, %v51
    %v387 = vxor.u32 %v382, 2147483648
    %v388 = vxor.u32 %v383, 2147483648
    %v389 = vxor.u32 %v384, 2147483648
    %v390 = vxor.u32 %v385, 2147483648
    %v391 = vxor.u32 %v386, 2147483648
    %v392 = vmul.f32 %v387, 1.442695
    %v393 = vpow.pop %v392
    %v394 = vmul.f32 %v388, 1.442695
    %v395 = vpow.pop %v394
    %v396 = vmul.f32 %v389, 1.442695
    %v397 = vpow.pop %v396
    %v398 = vmul.f32 %v390, 1.442695
    %v399 = vpow.pop %v398
    %v400 = vmul.f32 %v391, 1.442695
    %v401 = vpow.pop %v400
    %v402 = vadd.f32 %v393, 1.0
    %v403 = vadd.f32 %v395, 1.0
    %v404 = vadd.f32 %v397, 1.0
    %v405 = vadd.f32 %v399, 1.0
    %v406 = vadd.f32 %v401, 1.0
    %v407 = vrcp.pop %v402
    %v408 = vmul.f32 %v402, %v407
    %v409 = vsub.f32 1.0, %v408
    %v410 = vmul.f32 %v407, %v409
    %v411 = vadd.f32 %v407, %v410
    %vm412 = vweird.f32 %v402
    %vm413 = vweird.f32 %v407
    %vm414 = vmor %vm412, %vm413
    %v415 = vsel %vm414, %v407, %v411
    %v416 = vand.u32 2147483647, %v402
    %vm417 = vcmp.eq.f32.partialorder %v416, 8.507059e+37
    %v418 = vand.u32 %v402, 2147483648
    %v419 = vor.u32 1.1754944e-38, %v418
    %v420 = vsel %vm417, %v419, %v415
    %v421 = vmul.f32 1.0, %v420
    %v422 = vrcp.pop %v403
    %v423 = vmul.f32 %v403, %v422
    %v424 = vsub.f32 1.0, %v423
    %v425 = vmul.f32 %v422, %v424
    %v426 = vadd.f32 %v422, %v425
    %vm427 = vweird.f32 %v403
    %vm428 = vweird.f32 %v422
    %vm429 = vmor %vm427, %vm428
    %v430 = vsel %vm429, %v422, %v426
    %v431 = vand.u32 2147483647, %v403
    %vm432 = vcmp.eq.f32.partialorder %v431, 8.507059e+37
    %v433 = vand.u32 %v403, 2147483648
    %v434 = vor.u32 1.1754944e-38, %v433
    %v435 = vsel %vm432, %v434, %v430
    %v436 = vmul.f32 1.0, %v435
    %v437 = vrcp.pop %v404
    %v438 = vmul.f32 %v404, %v437
    %v439 = vsub.f32 1.0, %v438
    %v440 = vmul.f32 %v437, %v439
    %v441 = vadd.f32 %v437, %v440
    %vm442 = vweird.f32 %v404
    %vm443 = vweird.f32 %v437
    %vm444 = vmor %vm442, %vm443
    %v445 = vsel %vm444, %v437, %v441
    %v446 = vand.u32 2147483647, %v404
    %vm447 = vcmp.eq.f32.partialorder %v446, 8.507059e+37
    %v448 = vand.u32 %v404, 2147483648
    %v449 = vor.u32 1.1754944e-38, %v448
    %v450 = vsel %vm447, %v449, %v445
    %v451 = vmul.f32 1.0, %v450
    %v452 = vrcp.pop %v405
    %v453 = vmul.f32 %v405, %v452
    %v454 = vsub.f32 1.0, %v453
    %v455 = vmul.f32 %v452, %v454
    %v456 = vadd.f32 %v452, %v455
    %vm457 = vweird.f32 %v405
    %vm458 = vweird.f32 %v452
    %vm459 = vmor %vm457, %vm458
    %v460 = vsel %vm459, %v452, %v456
    %v461 = vand.u32 2147483647, %v405
    %vm462 = vcmp.eq.f32.partialorder %v461, 8.507059e+37
    %v463 = vand.u32 %v405, 2147483648
    %v464 = vor.u32 1.1754944e-38, %v463
    %v465 = vsel %vm462, %v464, %v460
    %v466 = vmul.f32 1.0, %v465
    %v467 = vrcp.pop %v406
    %v468 = vmul.f32 %v406, %v467
    %v469 = vsub.f32 1.0, %v468
    %v470 = vmul.f32 %v467, %v469
    %v471 = vadd.f32 %v467, %v470
    %vm472 = vweird.f32 %v406
    %vm473 = vweird.f32 %v467
    %vm474 = vmor %vm472, %vm473
    %v475 = vsel %vm474, %v467, %v471
    %v476 = vand.u32 2147483647, %v406
    %vm477 = vcmp.eq.f32.partialorder %v476, 8.507059e+37
    %v478 = vand.u32 %v406, 2147483648
    %v479 = vor.u32 1.1754944e-38, %v478
    %v480 = vsel %vm477, %v479, %v475
    %v481 = vmul.f32 1.0, %v480
    %s482 = scalar_lea.vmem %s3, 40
    %v483 = vld [vmem:[%s482] sm:$0xff]
    %v484 = vld [vmem:[%s482 + $0x8] sm:$0xff]
    %v485 = vld [vmem:[%s482 + $0x10] sm:$0xff]
    %v486 = vld [vmem:[%s482 + $0x18] sm:$0xff]
    %v487 = vld [vmem:[%s482 + $0x20] sm:$0xff]
    %v489 = vsel %vm62, %v351, 0
    %v492 = vsel %vm62, %v352, 0
    %v495 = vsel %vm62, %v353, 0
    %v498 = vsel %vm62, %v354, 0
    %v501 = vsel %vm62, %v355, 0
    %503 = vmatpush.msra.mxu0 0.0
    %504 = vmatpush.msra.mxu0 0.0
    %505 = vmatpush.msra.mxu0 0.0
    %506 = vmatpush.msra.mxu0 0.0
    %507 = vmatpush.msra.mxu0 0.0
    %508 = vmatpush.msra.mxu0 0.0
    %509 = vmatpush.msra.mxu0 0.0
    %510 = vmatpush.msra.mxu0 0.0
    %511 = vmatpush.msra.mxu0 0.0
    %512 = vmatpush.msra.mxu0 0.0
    %513 = vmatpush.msra.mxu0 0.0
    %514 = vmatpush.msra.mxu0 0.0
    %515 = vmatpush.msra.mxu0 %v41
    %516 = vmatpush.msra.mxu0 %v40
    %517 = vmatpush.msra.mxu0 %v39
    %518 = vmatpush.msra.mxu0 %v38
    %519 = vmatmul.f32.gmra.mxu0 %v489
    %v520 = vpop.f32.mrf.mxu0
    %v521 = vadd.f32 %v483, %v520
    %522 = vmatmul.f32.gmra.mxu0 %v492
    %v523 = vpop.f32.mrf.mxu0
    %v524 = vadd.f32 %v484, %v523
    %525 = vmatmul.f32.gmra.mxu0 %v495
    %v526 = vpop.f32.mrf.mxu0
    %v527 = vadd.f32 %v485, %v526
    %528 = vmatmul.f32.gmra.mxu0 %v498
    %v529 = vpop.f32.mrf.mxu0
    %v530 = vadd.f32 %v486, %v529
    %531 = vmatmul.f32.gmra.mxu0 %v501
    %v532 = vpop.f32.mrf.mxu0
    %v533 = vadd.f32 %v487, %v532
    %534 = vdwg.mxu0
    %vm535 = vcmp.ge.f32.partialorder %v521, 0.0
    %vm536 = vcmp.ge.f32.partialorder %v524, 0.0
    %vm537 = vcmp.ge.f32.partialorder %v527, 0.0
    %vm538 = vcmp.ge.f32.partialorder %v530, 0.0
    %vm539 = vcmp.ge.f32.partialorder %v533, 0.0
    %v540 = vmul.f32 %v235, %v521
    %v541 = vmul.f32 %v235, %v524
    %v542 = vmul.f32 %v235, %v527
    %v543 = vmul.f32 %v235, %v530
    %v544 = vmul.f32 %v235, %v533
    %v545 = vsel %vm535, %v521, %v540
    %v546 = vsel %vm536, %v524, %v541
    %v547 = vsel %vm537, %v527, %v542
    %v548 = vsel %vm538, %v530, %v543
    %v549 = vsel %vm539, %v533, %v544
    %551 = vset.pattern.permute.xlu0 1
    %552 = vperm.xlu0 %551, %v421
    %v553 = vpop.permute.xlu0 %552
    %556 = vset.pattern.permute.xlu0 1
    %557 = vperm.xlu0 %556, %v436
    %v558 = vpop.permute.xlu0 %557
    %561 = vset.pattern.permute.xlu0 1
    %562 = vperm.xlu0 %561, %v451
    %v563 = vpop.permute.xlu0 %562
    %566 = vset.pattern.permute.xlu0 1
    %567 = vperm.xlu0 %566, %v466
    %v568 = vpop.permute.xlu0 %567
    %571 = vset.pattern.permute.xlu0 1
    %572 = vperm.xlu0 %571, %v481
    %v573 = vpop.permute.xlu0 %572
    %v575 = vmul.f32 %v553, %v545
    %v576 = vmul.f32 %v558, %v546
    %v577 = vmul.f32 %v563, %v547
    %v578 = vmul.f32 %v568, %v548
    %v579 = vmul.f32 %v573, %v549
    %v580 = vadd.f32 %v351, %v575
    %v581 = vadd.f32 %v352, %v576
    %v582 = vadd.f32 %v353, %v577
    %v583 = vadd.f32 %v354, %v578
    %v584 = vadd.f32 %v355, %v579
    %v585 = vmul.f32 %v580, %v580
    %v586 = vmul.f32 %v581, %v581
    %v587 = vmul.f32 %v582, %v582
    %v588 = vmul.f32 %v583, %v583
    %v589 = vmul.f32 %v584, %v584
    %v590 = vsel %vm62, %v585, 0.0
    %591 = vadd.xlane.f32.xlu0 %v590
    %v592 = vpop.xlane.xlu0 %591
    %v593 = vsel %vm62, %v586, 0.0
    %594 = vadd.xlane.f32.xlu0 %v593
    %v595 = vpop.xlane.xlu0 %594
    %v596 = vsel %vm62, %v587, 0.0
    %597 = vadd.xlane.f32.xlu0 %v596
    %v598 = vpop.xlane.xlu0 %597
    %v599 = vsel %vm62, %v588, 0.0
    %600 = vadd.xlane.f32.xlu0 %v599
    %v601 = vpop.xlane.xlu0 %600
    %v602 = vsel %vm62, %v589, 0.0
    %603 = vadd.xlane.f32.xlu0 %v602
    %v604 = vpop.xlane.xlu0 %603
    %v605 = vrsqrt.pop %v592
    %v606 = vmul.f32 %v605, %v592
    %v607 = vmul.f32 %v606, %v605
    %v608 = vmul.f32 0.5, %v607
    %v609 = vsub.f32 1.5, %v608
    %v610 = vmul.f32 %v605, %v609
    %vm611 = vweird.f32 %v592
    %vm612 = vweird.f32 %v605
    %vm613 = vmor %vm611, %vm612
    %v614 = vsel %vm613, %v605, %v610
    %v615 = vrsqrt.pop %v595
    %v616 = vmul.f32 %v615, %v595
    %v617 = vmul.f32 %v616, %v615
    %v618 = vmul.f32 0.5, %v617
    %v619 = vsub.f32 1.5, %v618
    %v620 = vmul.f32 %v615, %v619
    %vm621 = vweird.f32 %v595
    %vm622 = vweird.f32 %v615
    %vm623 = vmor %vm621, %vm622
    %v624 = vsel %vm623, %v615, %v620
    %v625 = vrsqrt.pop %v598
    %v626 = vmul.f32 %v625, %v598
    %v627 = vmul.f32 %v626, %v625
    %v628 = vmul.f32 0.5, %v627
    %v629 = vsub.f32 1.5, %v628
    %v630 = vmul.f32 %v625, %v629
    %vm631 = vweird.f32 %v598
    %vm632 = vweird.f32 %v625
    %vm633 = vmor %vm631, %vm632
    %v634 = vsel %vm633, %v625, %v630
    %v635 = vrsqrt.pop %v601
    %v636 = vmul.f32 %v635, %v601
    %v637 = vmul.f32 %v636, %v635
    %v638 = vmul.f32 0.5, %v637
    %v639 = vsub.f32 1.5, %v638
    %v640 = vmul.f32 %v635, %v639
    %vm641 = vweird.f32 %v601
    %vm642 = vweird.f32 %v635
    %vm643 = vmor %vm641, %vm642
    %v644 = vsel %vm643, %v635, %v640
    %v645 = vrsqrt.pop %v604
    %v646 = vmul.f32 %v645, %v604
    %v647 = vmul.f32 %v646, %v645
    %v648 = vmul.f32 0.5, %v647
    %v649 = vsub.f32 1.5, %v648
    %v650 = vmul.f32 %v645, %v649
    %vm651 = vweird.f32 %v604
    %vm652 = vweird.f32 %v645
    %vm653 = vmor %vm651, %vm652
    %v654 = vsel %vm653, %v645, %v650
    %v655 = vmul.f32 %v580, %v614
    %v656 = vmul.f32 %v581, %v624
    %v657 = vmul.f32 %v582, %v634
    %v658 = vmul.f32 %v583, %v644
    %v659 = vmul.f32 %v584, %v654
    %s660 = scalar_lea.vmem %s1, 80
    %v661 = vld [vmem:[%s660] sm:$0xff]
    %v662 = vld [vmem:[%s660 + $0x8] sm:$0xff]
    %v663 = vld [vmem:[%s660 + $0x10] sm:$0xff]
    %v664 = vld [vmem:[%s660 + $0x18] sm:$0xff]
    %v665 = vld [vmem:[%s660 + $0x20] sm:$0xff]
    %v666 = vmul.f32 %v655, %v661
    %v667 = vmul.f32 %v656, %v662
    %v668 = vmul.f32 %v657, %v663
    %v669 = vmul.f32 %v658, %v664
    %v670 = vmul.f32 %v659, %v665
    %v671 = vsel %vm62, %v666, 0.0
    %672 = vadd.xlane.f32.xlu0 %v671
    %v673 = vpop.xlane.xlu0 %672
    %v674 = vsel %vm62, %v667, 0.0
    %675 = vadd.xlane.f32.xlu0 %v674
    %v676 = vpop.xlane.xlu0 %675
    %v677 = vsel %vm62, %v668, 0.0
    %678 = vadd.xlane.f32.xlu0 %v677
    %v679 = vpop.xlane.xlu0 %678
    %v680 = vsel %vm62, %v669, 0.0
    %681 = vadd.xlane.f32.xlu0 %v680
    %v682 = vpop.xlane.xlu0 %681
    %v683 = vsel %vm62, %v670, 0.0
    %684 = vadd.xlane.f32.xlu0 %v683
    %v685 = vpop.xlane.xlu0 %684
    %v686 = vadd.f32 %v673, %v47
    %v687 = vadd.f32 %v676, %v48
    %v688 = vadd.f32 %v679, %v49
    %v689 = vadd.f32 %v682, %v50
    %v690 = vadd.f32 %v685, %v51
    %v691 = vxor.u32 %v686, 2147483648
    %v692 = vxor.u32 %v687, 2147483648
    %v693 = vxor.u32 %v688, 2147483648
    %v694 = vxor.u32 %v689, 2147483648
    %v695 = vxor.u32 %v690, 2147483648
    %v696 = vmul.f32 %v691, 1.442695
    %v697 = vpow.pop %v696
    %v698 = vmul.f32 %v692, 1.442695
    %v699 = vpow.pop %v698
    %v700 = vmul.f32 %v693, 1.442695
    %v701 = vpow.pop %v700
    %v702 = vmul.f32 %v694, 1.442695
    %v703 = vpow.pop %v702
    %v704 = vmul.f32 %v695, 1.442695
    %v705 = vpow.pop %v704
    %v706 = vadd.f32 %v697, 1.0
    %v707 = vadd.f32 %v699, 1.0
    %v708 = vadd.f32 %v701, 1.0
    %v709 = vadd.f32 %v703, 1.0
    %v710 = vadd.f32 %v705, 1.0
    %v711 = vrcp.pop %v706
    %v712 = vmul.f32 %v706, %v711
    %v713 = vsub.f32 1.0, %v712
    %v714 = vmul.f32 %v711, %v713
    %v715 = vadd.f32 %v711, %v714
    %vm716 = vweird.f32 %v706
    %vm717 = vweird.f32 %v711
    %vm718 = vmor %vm716, %vm717
    %v719 = vsel %vm718, %v711, %v715
    %v720 = vand.u32 2147483647, %v706
    %vm721 = vcmp.eq.f32.partialorder %v720, 8.507059e+37
    %v722 = vand.u32 %v706, 2147483648
    %v723 = vor.u32 1.1754944e-38, %v722
    %v724 = vsel %vm721, %v723, %v719
    %v725 = vmul.f32 1.0, %v724
    %v726 = vrcp.pop %v707
    %v727 = vmul.f32 %v707, %v726
    %v728 = vsub.f32 1.0, %v727
    %v729 = vmul.f32 %v726, %v728
    %v730 = vadd.f32 %v726, %v729
    %vm731 = vweird.f32 %v707
    %vm732 = vweird.f32 %v726
    %vm733 = vmor %vm731, %vm732
    %v734 = vsel %vm733, %v726, %v730
    %v735 = vand.u32 2147483647, %v707
    %vm736 = vcmp.eq.f32.partialorder %v735, 8.507059e+37
    %v737 = vand.u32 %v707, 2147483648
    %v738 = vor.u32 1.1754944e-38, %v737
    %v739 = vsel %vm736, %v738, %v734
    %v740 = vmul.f32 1.0, %v739
    %v741 = vrcp.pop %v708
    %v742 = vmul.f32 %v708, %v741
    %v743 = vsub.f32 1.0, %v742
    %v744 = vmul.f32 %v741, %v743
    %v745 = vadd.f32 %v741, %v744
    %vm746 = vweird.f32 %v708
    %vm747 = vweird.f32 %v741
    %vm748 = vmor %vm746, %vm747
    %v749 = vsel %vm748, %v741, %v745
    %v750 = vand.u32 2147483647, %v708
    %vm751 = vcmp.eq.f32.partialorder %v750, 8.507059e+37
    %v752 = vand.u32 %v708, 2147483648
    %v753 = vor.u32 1.1754944e-38, %v752
    %v754 = vsel %vm751, %v753, %v749
    %v755 = vmul.f32 1.0, %v754
    %v756 = vrcp.pop %v709
    %v757 = vmul.f32 %v709, %v756
    %v758 = vsub.f32 1.0, %v757
    %v759 = vmul.f32 %v756, %v758
    %v760 = vadd.f32 %v756, %v759
    %vm761 = vweird.f32 %v709
    %vm762 = vweird.f32 %v756
    %vm763 = vmor %vm761, %vm762
    %v764 = vsel %vm763, %v756, %v760
    %v765 = vand.u32 2147483647, %v709
    %vm766 = vcmp.eq.f32.partialorder %v765, 8.507059e+37
    %v767 = vand.u32 %v709, 2147483648
    %v768 = vor.u32 1.1754944e-38, %v767
    %v769 = vsel %vm766, %v768, %v764
    %v770 = vmul.f32 1.0, %v769
    %v771 = vrcp.pop %v710
    %v772 = vmul.f32 %v710, %v771
    %v773 = vsub.f32 1.0, %v772
    %v774 = vmul.f32 %v771, %v773
    %v775 = vadd.f32 %v771, %v774
    %vm776 = vweird.f32 %v710
    %vm777 = vweird.f32 %v771
    %vm778 = vmor %vm776, %vm777
    %v779 = vsel %vm778, %v771, %v775
    %v780 = vand.u32 2147483647, %v710
    %vm781 = vcmp.eq.f32.partialorder %v780, 8.507059e+37
    %v782 = vand.u32 %v710, 2147483648
    %v783 = vor.u32 1.1754944e-38, %v782
    %v784 = vsel %vm781, %v783, %v779
    %v785 = vmul.f32 1.0, %v784
    %s786 = scalar_lea.vmem %s3, 80
    %v787 = vld [vmem:[%s786] sm:$0xff]
    %v788 = vld [vmem:[%s786 + $0x8] sm:$0xff]
    %v789 = vld [vmem:[%s786 + $0x10] sm:$0xff]
    %v790 = vld [vmem:[%s786 + $0x18] sm:$0xff]
    %v791 = vld [vmem:[%s786 + $0x20] sm:$0xff]
    %v793 = vsel %vm62, %v655, 0
    %v796 = vsel %vm62, %v656, 0
    %v799 = vsel %vm62, %v657, 0
    %v802 = vsel %vm62, %v658, 0
    %v805 = vsel %vm62, %v659, 0
    %807 = vmatpush.msra.mxu0 0.0
    %808 = vmatpush.msra.mxu0 0.0
    %809 = vmatpush.msra.mxu0 0.0
    %810 = vmatpush.msra.mxu0 0.0
    %811 = vmatpush.msra.mxu0 0.0
    %812 = vmatpush.msra.mxu0 0.0
    %813 = vmatpush.msra.mxu0 0.0
    %814 = vmatpush.msra.mxu0 0.0
    %815 = vmatpush.msra.mxu0 0.0
    %816 = vmatpush.msra.mxu0 0.0
    %817 = vmatpush.msra.mxu0 0.0
    %818 = vmatpush.msra.mxu0 0.0
    %819 = vmatpush.msra.mxu0 %v41
    %820 = vmatpush.msra.mxu0 %v40
    %821 = vmatpush.msra.mxu0 %v39
    %822 = vmatpush.msra.mxu0 %v38
    %823 = vmatmul.f32.gmra.mxu0 %v793
    %v824 = vpop.f32.mrf.mxu0
    %v825 = vadd.f32 %v787, %v824
    %826 = vmatmul.f32.gmra.mxu0 %v796
    %v827 = vpop.f32.mrf.mxu0
    %v828 = vadd.f32 %v788, %v827
    %829 = vmatmul.f32.gmra.mxu0 %v799
    %v830 = vpop.f32.mrf.mxu0
    %v831 = vadd.f32 %v789, %v830
    %832 = vmatmul.f32.gmra.mxu0 %v802
    %v833 = vpop.f32.mrf.mxu0
    %v834 = vadd.f32 %v790, %v833
    %835 = vmatmul.f32.gmra.mxu0 %v805
    %v836 = vpop.f32.mrf.mxu0
    %v837 = vadd.f32 %v791, %v836
    %838 = vdwg.mxu0
    %vm839 = vcmp.ge.f32.partialorder %v825, 0.0
    %vm840 = vcmp.ge.f32.partialorder %v828, 0.0
    %vm841 = vcmp.ge.f32.partialorder %v831, 0.0
    %vm842 = vcmp.ge.f32.partialorder %v834, 0.0
    %vm843 = vcmp.ge.f32.partialorder %v837, 0.0
    %v844 = vmul.f32 %v235, %v825
    %v845 = vmul.f32 %v235, %v828
    %v846 = vmul.f32 %v235, %v831
    %v847 = vmul.f32 %v235, %v834
    %v848 = vmul.f32 %v235, %v837
    %v849 = vsel %vm839, %v825, %v844
    %v850 = vsel %vm840, %v828, %v845
    %v851 = vsel %vm841, %v831, %v846
    %v852 = vsel %vm842, %v834, %v847
    %v853 = vsel %vm843, %v837, %v848
    %855 = vset.pattern.permute.xlu0 2
    %856 = vperm.xlu0 %855, %v725
    %v857 = vpop.permute.xlu0 %856
    %860 = vset.pattern.permute.xlu0 2
    %861 = vperm.xlu0 %860, %v740
    %v862 = vpop.permute.xlu0 %861
    %865 = vset.pattern.permute.xlu0 2
    %866 = vperm.xlu0 %865, %v755
    %v867 = vpop.permute.xlu0 %866
    %870 = vset.pattern.permute.xlu0 2
    %871 = vperm.xlu0 %870, %v770
    %v872 = vpop.permute.xlu0 %871
    %875 = vset.pattern.permute.xlu0 2
    %876 = vperm.xlu0 %875, %v785
    %v877 = vpop.permute.xlu0 %876
    %v879 = vmul.f32 %v857, %v849
    %v880 = vmul.f32 %v862, %v850
    %v881 = vmul.f32 %v867, %v851
    %v882 = vmul.f32 %v872, %v852
    %v883 = vmul.f32 %v877, %v853
    %v884 = vadd.f32 %v655, %v879
    %v885 = vadd.f32 %v656, %v880
    %v886 = vadd.f32 %v657, %v881
    %v887 = vadd.f32 %v658, %v882
    %v888 = vadd.f32 %v659, %v883
    %v889 = vmul.f32 %v884, %v884
    %v890 = vmul.f32 %v885, %v885
    %v891 = vmul.f32 %v886, %v886
    %v892 = vmul.f32 %v887, %v887
    %v893 = vmul.f32 %v888, %v888
    %v894 = vsel %vm62, %v889, 0.0
    %895 = vadd.xlane.f32.xlu0 %v894
    %v896 = vpop.xlane.xlu0 %895
    %v897 = vsel %vm62, %v890, 0.0
    %898 = vadd.xlane.f32.xlu0 %v897
    %v899 = vpop.xlane.xlu0 %898
    %v900 = vsel %vm62, %v891, 0.0
    %901 = vadd.xlane.f32.xlu0 %v900
    %v902 = vpop.xlane.xlu0 %901
    %v903 = vsel %vm62, %v892, 0.0
    %904 = vadd.xlane.f32.xlu0 %v903
    %v905 = vpop.xlane.xlu0 %904
    %v906 = vsel %vm62, %v893, 0.0
    %907 = vadd.xlane.f32.xlu0 %v906
    %v908 = vpop.xlane.xlu0 %907
    %v909 = vrsqrt.pop %v896
    %v910 = vmul.f32 %v909, %v896
    %v911 = vmul.f32 %v910, %v909
    %v912 = vmul.f32 0.5, %v911
    %v913 = vsub.f32 1.5, %v912
    %v914 = vmul.f32 %v909, %v913
    %vm915 = vweird.f32 %v896
    %vm916 = vweird.f32 %v909
    %vm917 = vmor %vm915, %vm916
    %v918 = vsel %vm917, %v909, %v914
    %v919 = vrsqrt.pop %v899
    %v920 = vmul.f32 %v919, %v899
    %v921 = vmul.f32 %v920, %v919
    %v922 = vmul.f32 0.5, %v921
    %v923 = vsub.f32 1.5, %v922
    %v924 = vmul.f32 %v919, %v923
    %vm925 = vweird.f32 %v899
    %vm926 = vweird.f32 %v919
    %vm927 = vmor %vm925, %vm926
    %v928 = vsel %vm927, %v919, %v924
    %v929 = vrsqrt.pop %v902
    %v930 = vmul.f32 %v929, %v902
    %v931 = vmul.f32 %v930, %v929
    %v932 = vmul.f32 0.5, %v931
    %v933 = vsub.f32 1.5, %v932
    %v934 = vmul.f32 %v929, %v933
    %vm935 = vweird.f32 %v902
    %vm936 = vweird.f32 %v929
    %vm937 = vmor %vm935, %vm936
    %v938 = vsel %vm937, %v929, %v934
    %v939 = vrsqrt.pop %v905
    %v940 = vmul.f32 %v939, %v905
    %v941 = vmul.f32 %v940, %v939
    %v942 = vmul.f32 0.5, %v941
    %v943 = vsub.f32 1.5, %v942
    %v944 = vmul.f32 %v939, %v943
    %vm945 = vweird.f32 %v905
    %vm946 = vweird.f32 %v939
    %vm947 = vmor %vm945, %vm946
    %v948 = vsel %vm947, %v939, %v944
    %v949 = vrsqrt.pop %v908
    %v950 = vmul.f32 %v949, %v908
    %v951 = vmul.f32 %v950, %v949
    %v952 = vmul.f32 0.5, %v951
    %v953 = vsub.f32 1.5, %v952
    %v954 = vmul.f32 %v949, %v953
    %vm955 = vweird.f32 %v908
    %vm956 = vweird.f32 %v949
    %vm957 = vmor %vm955, %vm956
    %v958 = vsel %vm957, %v949, %v954
    %v959 = vmul.f32 %v884, %v918
    %v960 = vmul.f32 %v885, %v928
    %v961 = vmul.f32 %v886, %v938
    %v962 = vmul.f32 %v887, %v948
    %v963 = vmul.f32 %v888, %v958
    %s964 = scalar_lea.vmem %s1, 120
    %v965 = vld [vmem:[%s964] sm:$0xff]
    %v966 = vld [vmem:[%s964 + $0x8] sm:$0xff]
    %v967 = vld [vmem:[%s964 + $0x10] sm:$0xff]
    %v968 = vld [vmem:[%s964 + $0x18] sm:$0xff]
    %v969 = vld [vmem:[%s964 + $0x20] sm:$0xff]
    %v970 = vmul.f32 %v959, %v965
    %v971 = vmul.f32 %v960, %v966
    %v972 = vmul.f32 %v961, %v967
    %v973 = vmul.f32 %v962, %v968
    %v974 = vmul.f32 %v963, %v969
    %v975 = vsel %vm62, %v970, 0.0
    %976 = vadd.xlane.f32.xlu0 %v975
    %v977 = vpop.xlane.xlu0 %976
    %v978 = vsel %vm62, %v971, 0.0
    %979 = vadd.xlane.f32.xlu0 %v978
    %v980 = vpop.xlane.xlu0 %979
    %v981 = vsel %vm62, %v972, 0.0
    %982 = vadd.xlane.f32.xlu0 %v981
    %v983 = vpop.xlane.xlu0 %982
    %v984 = vsel %vm62, %v973, 0.0
    %985 = vadd.xlane.f32.xlu0 %v984
    %v986 = vpop.xlane.xlu0 %985
    %v987 = vsel %vm62, %v974, 0.0
    %988 = vadd.xlane.f32.xlu0 %v987
    %v989 = vpop.xlane.xlu0 %988
    %v990 = vadd.f32 %v977, %v47
    %v991 = vadd.f32 %v980, %v48
    %v992 = vadd.f32 %v983, %v49
    %v993 = vadd.f32 %v986, %v50
    %v994 = vadd.f32 %v989, %v51
    %v995 = vxor.u32 %v990, 2147483648
    %v996 = vxor.u32 %v991, 2147483648
    %v997 = vxor.u32 %v992, 2147483648
    %v998 = vxor.u32 %v993, 2147483648
    %v999 = vxor.u32 %v994, 2147483648
    %v1000 = vmul.f32 %v995, 1.442695
    %v1001 = vpow.pop %v1000
    %v1002 = vmul.f32 %v996, 1.442695
    %v1003 = vpow.pop %v1002
    %v1004 = vmul.f32 %v997, 1.442695
    %v1005 = vpow.pop %v1004
    %v1006 = vmul.f32 %v998, 1.442695
    %v1007 = vpow.pop %v1006
    %v1008 = vmul.f32 %v999, 1.442695
    %v1009 = vpow.pop %v1008
    %v1010 = vadd.f32 %v1001, 1.0
    %v1011 = vadd.f32 %v1003, 1.0
    %v1012 = vadd.f32 %v1005, 1.0
    %v1013 = vadd.f32 %v1007, 1.0
    %v1014 = vadd.f32 %v1009, 1.0
    %v1015 = vrcp.pop %v1010
    %v1016 = vmul.f32 %v1010, %v1015
    %v1017 = vsub.f32 1.0, %v1016
    %v1018 = vmul.f32 %v1015, %v1017
    %v1019 = vadd.f32 %v1015, %v1018
    %vm1020 = vweird.f32 %v1010
    %vm1021 = vweird.f32 %v1015
    %vm1022 = vmor %vm1020, %vm1021
    %v1023 = vsel %vm1022, %v1015, %v1019
    %v1024 = vand.u32 2147483647, %v1010
    %vm1025 = vcmp.eq.f32.partialorder %v1024, 8.507059e+37
    %v1026 = vand.u32 %v1010, 2147483648
    %v1027 = vor.u32 1.1754944e-38, %v1026
    %v1028 = vsel %vm1025, %v1027, %v1023
    %v1029 = vmul.f32 1.0, %v1028
    %v1030 = vrcp.pop %v1011
    %v1031 = vmul.f32 %v1011, %v1030
    %v1032 = vsub.f32 1.0, %v1031
    %v1033 = vmul.f32 %v1030, %v1032
    %v1034 = vadd.f32 %v1030, %v1033
    %vm1035 = vweird.f32 %v1011
    %vm1036 = vweird.f32 %v1030
    %vm1037 = vmor %vm1035, %vm1036
    %v1038 = vsel %vm1037, %v1030, %v1034
    %v1039 = vand.u32 2147483647, %v1011
    %vm1040 = vcmp.eq.f32.partialorder %v1039, 8.507059e+37
    %v1041 = vand.u32 %v1011, 2147483648
    %v1042 = vor.u32 1.1754944e-38, %v1041
    %v1043 = vsel %vm1040, %v1042, %v1038
    %v1044 = vmul.f32 1.0, %v1043
    %v1045 = vrcp.pop %v1012
    %v1046 = vmul.f32 %v1012, %v1045
    %v1047 = vsub.f32 1.0, %v1046
    %v1048 = vmul.f32 %v1045, %v1047
    %v1049 = vadd.f32 %v1045, %v1048
    %vm1050 = vweird.f32 %v1012
    %vm1051 = vweird.f32 %v1045
    %vm1052 = vmor %vm1050, %vm1051
    %v1053 = vsel %vm1052, %v1045, %v1049
    %v1054 = vand.u32 2147483647, %v1012
    %vm1055 = vcmp.eq.f32.partialorder %v1054, 8.507059e+37
    %v1056 = vand.u32 %v1012, 2147483648
    %v1057 = vor.u32 1.1754944e-38, %v1056
    %v1058 = vsel %vm1055, %v1057, %v1053
    %v1059 = vmul.f32 1.0, %v1058
    %v1060 = vrcp.pop %v1013
    %v1061 = vmul.f32 %v1013, %v1060
    %v1062 = vsub.f32 1.0, %v1061
    %v1063 = vmul.f32 %v1060, %v1062
    %v1064 = vadd.f32 %v1060, %v1063
    %vm1065 = vweird.f32 %v1013
    %vm1066 = vweird.f32 %v1060
    %vm1067 = vmor %vm1065, %vm1066
    %v1068 = vsel %vm1067, %v1060, %v1064
    %v1069 = vand.u32 2147483647, %v1013
    %vm1070 = vcmp.eq.f32.partialorder %v1069, 8.507059e+37
    %v1071 = vand.u32 %v1013, 2147483648
    %v1072 = vor.u32 1.1754944e-38, %v1071
    %v1073 = vsel %vm1070, %v1072, %v1068
    %v1074 = vmul.f32 1.0, %v1073
    %v1075 = vrcp.pop %v1014
    %v1076 = vmul.f32 %v1014, %v1075
    %v1077 = vsub.f32 1.0, %v1076
    %v1078 = vmul.f32 %v1075, %v1077
    %v1079 = vadd.f32 %v1075, %v1078
    %vm1080 = vweird.f32 %v1014
    %vm1081 = vweird.f32 %v1075
    %vm1082 = vmor %vm1080, %vm1081
    %v1083 = vsel %vm1082, %v1075, %v1079
    %v1084 = vand.u32 2147483647, %v1014
    %vm1085 = vcmp.eq.f32.partialorder %v1084, 8.507059e+37
    %v1086 = vand.u32 %v1014, 2147483648
    %v1087 = vor.u32 1.1754944e-38, %v1086
    %v1088 = vsel %vm1085, %v1087, %v1083
    %v1089 = vmul.f32 1.0, %v1088
    %s1090 = scalar_lea.vmem %s3, 120
    %v1091 = vld [vmem:[%s1090] sm:$0xff]
    %v1092 = vld [vmem:[%s1090 + $0x8] sm:$0xff]
    %v1093 = vld [vmem:[%s1090 + $0x10] sm:$0xff]
    %v1094 = vld [vmem:[%s1090 + $0x18] sm:$0xff]
    %v1095 = vld [vmem:[%s1090 + $0x20] sm:$0xff]
    %v1097 = vsel %vm62, %v959, 0
    %v1100 = vsel %vm62, %v960, 0
    %v1103 = vsel %vm62, %v961, 0
    %v1106 = vsel %vm62, %v962, 0
    %v1109 = vsel %vm62, %v963, 0
    %1111 = vmatpush.msra.mxu0 0.0
    %1112 = vmatpush.msra.mxu0 0.0
    %1113 = vmatpush.msra.mxu0 0.0
    %1114 = vmatpush.msra.mxu0 0.0
    %1115 = vmatpush.msra.mxu0 0.0
    %1116 = vmatpush.msra.mxu0 0.0
    %1117 = vmatpush.msra.mxu0 0.0
    %1118 = vmatpush.msra.mxu0 0.0
    %1119 = vmatpush.msra.mxu0 0.0
    %1120 = vmatpush.msra.mxu0 0.0
    %1121 = vmatpush.msra.mxu0 0.0
    %1122 = vmatpush.msra.mxu0 0.0
    %1123 = vmatpush.msra.mxu0 %v41
    %1124 = vmatpush.msra.mxu0 %v40
    %1125 = vmatpush.msra.mxu0 %v39
    %1126 = vmatpush.msra.mxu0 %v38
    %1127 = vmatmul.f32.gmra.mxu0 %v1097
    %v1128 = vpop.f32.mrf.mxu0
    %v1129 = vadd.f32 %v1091, %v1128
    %1130 = vmatmul.f32.gmra.mxu0 %v1100
    %v1131 = vpop.f32.mrf.mxu0
    %v1132 = vadd.f32 %v1092, %v1131
    %1133 = vmatmul.f32.gmra.mxu0 %v1103
    %v1134 = vpop.f32.mrf.mxu0
    %v1135 = vadd.f32 %v1093, %v1134
    %1136 = vmatmul.f32.gmra.mxu0 %v1106
    %v1137 = vpop.f32.mrf.mxu0
    %v1138 = vadd.f32 %v1094, %v1137
    %1139 = vmatmul.f32.gmra.mxu0 %v1109
    %v1140 = vpop.f32.mrf.mxu0
    %v1141 = vadd.f32 %v1095, %v1140
    %1142 = vdwg.mxu0
    %vm1143 = vcmp.ge.f32.partialorder %v1129, 0.0
    %vm1144 = vcmp.ge.f32.partialorder %v1132, 0.0
    %vm1145 = vcmp.ge.f32.partialorder %v1135, 0.0
    %vm1146 = vcmp.ge.f32.partialorder %v1138, 0.0
    %vm1147 = vcmp.ge.f32.partialorder %v1141, 0.0
    %v1148 = vmul.f32 %v235, %v1129
    %v1149 = vmul.f32 %v235, %v1132
    %v1150 = vmul.f32 %v235, %v1135
    %v1151 = vmul.f32 %v235, %v1138
    %v1152 = vmul.f32 %v235, %v1141
    %v1153 = vsel %vm1143, %v1129, %v1148
    %v1154 = vsel %vm1144, %v1132, %v1149
    %v1155 = vsel %vm1145, %v1135, %v1150
    %v1156 = vsel %vm1146, %v1138, %v1151
    %v1157 = vsel %vm1147, %v1141, %v1152
    %1159 = vset.pattern.permute.xlu0 3
    %1160 = vperm.xlu0 %1159, %v1029
    %v1161 = vpop.permute.xlu0 %1160
    %1164 = vset.pattern.permute.xlu0 3
    %1165 = vperm.xlu0 %1164, %v1044
    %v1166 = vpop.permute.xlu0 %1165
    %1169 = vset.pattern.permute.xlu0 3
    %1170 = vperm.xlu0 %1169, %v1059
    %v1171 = vpop.permute.xlu0 %1170
    %1174 = vset.pattern.permute.xlu0 3
    %1175 = vperm.xlu0 %1174, %v1074
    %v1176 = vpop.permute.xlu0 %1175
    %1179 = vset.pattern.permute.xlu0 3
    %1180 = vperm.xlu0 %1179, %v1089
    %v1181 = vpop.permute.xlu0 %1180
    %v1183 = vmul.f32 %v1161, %v1153
    %v1184 = vmul.f32 %v1166, %v1154
    %v1185 = vmul.f32 %v1171, %v1155
    %v1186 = vmul.f32 %v1176, %v1156
    %v1187 = vmul.f32 %v1181, %v1157
    %v1188 = vadd.f32 %v959, %v1183
    %v1189 = vadd.f32 %v960, %v1184
    %v1190 = vadd.f32 %v961, %v1185
    %v1191 = vadd.f32 %v962, %v1186
    %v1192 = vadd.f32 %v963, %v1187
    %v1193 = vmul.f32 %v1188, %v1188
    %v1194 = vmul.f32 %v1189, %v1189
    %v1195 = vmul.f32 %v1190, %v1190
    %v1196 = vmul.f32 %v1191, %v1191
    %v1197 = vmul.f32 %v1192, %v1192
    %v1198 = vsel %vm62, %v1193, 0.0
    %1199 = vadd.xlane.f32.xlu0 %v1198
    %v1200 = vpop.xlane.xlu0 %1199
    %v1201 = vsel %vm62, %v1194, 0.0
    %1202 = vadd.xlane.f32.xlu0 %v1201
    %v1203 = vpop.xlane.xlu0 %1202
    %v1204 = vsel %vm62, %v1195, 0.0
    %1205 = vadd.xlane.f32.xlu0 %v1204
    %v1206 = vpop.xlane.xlu0 %1205
    %v1207 = vsel %vm62, %v1196, 0.0
    %1208 = vadd.xlane.f32.xlu0 %v1207
    %v1209 = vpop.xlane.xlu0 %1208
    %v1210 = vsel %vm62, %v1197, 0.0
    %1211 = vadd.xlane.f32.xlu0 %v1210
    %v1212 = vpop.xlane.xlu0 %1211
    %v1213 = vrsqrt.pop %v1200
    %v1214 = vmul.f32 %v1213, %v1200
    %v1215 = vmul.f32 %v1214, %v1213
    %v1216 = vmul.f32 0.5, %v1215
    %v1217 = vsub.f32 1.5, %v1216
    %v1218 = vmul.f32 %v1213, %v1217
    %vm1219 = vweird.f32 %v1200
    %vm1220 = vweird.f32 %v1213
    %vm1221 = vmor %vm1219, %vm1220
    %v1222 = vsel %vm1221, %v1213, %v1218
    %v1223 = vrsqrt.pop %v1203
    %v1224 = vmul.f32 %v1223, %v1203
    %v1225 = vmul.f32 %v1224, %v1223
    %v1226 = vmul.f32 0.5, %v1225
    %v1227 = vsub.f32 1.5, %v1226
    %v1228 = vmul.f32 %v1223, %v1227
    %vm1229 = vweird.f32 %v1203
    %vm1230 = vweird.f32 %v1223
    %vm1231 = vmor %vm1229, %vm1230
    %v1232 = vsel %vm1231, %v1223, %v1228
    %v1233 = vrsqrt.pop %v1206
    %v1234 = vmul.f32 %v1233, %v1206
    %v1235 = vmul.f32 %v1234, %v1233
    %v1236 = vmul.f32 0.5, %v1235
    %v1237 = vsub.f32 1.5, %v1236
    %v1238 = vmul.f32 %v1233, %v1237
    %vm1239 = vweird.f32 %v1206
    %vm1240 = vweird.f32 %v1233
    %vm1241 = vmor %vm1239, %vm1240
    %v1242 = vsel %vm1241, %v1233, %v1238
    %v1243 = vrsqrt.pop %v1209
    %v1244 = vmul.f32 %v1243, %v1209
    %v1245 = vmul.f32 %v1244, %v1243
    %v1246 = vmul.f32 0.5, %v1245
    %v1247 = vsub.f32 1.5, %v1246
    %v1248 = vmul.f32 %v1243, %v1247
    %vm1249 = vweird.f32 %v1209
    %vm1250 = vweird.f32 %v1243
    %vm1251 = vmor %vm1249, %vm1250
    %v1252 = vsel %vm1251, %v1243, %v1248
    %v1253 = vrsqrt.pop %v1212
    %v1254 = vmul.f32 %v1253, %v1212
    %v1255 = vmul.f32 %v1254, %v1253
    %v1256 = vmul.f32 0.5, %v1255
    %v1257 = vsub.f32 1.5, %v1256
    %v1258 = vmul.f32 %v1253, %v1257
    %vm1259 = vweird.f32 %v1212
    %vm1260 = vweird.f32 %v1253
    %vm1261 = vmor %vm1259, %vm1260
    %v1262 = vsel %vm1261, %v1253, %v1258
    %v1263 = vmul.f32 %v1188, %v1222
    %v1264 = vmul.f32 %v1189, %v1232
    %v1265 = vmul.f32 %v1190, %v1242
    %v1266 = vmul.f32 %v1191, %v1252
    %v1267 = vmul.f32 %v1192, %v1262
    %s1268 = scalar_lea.vmem %s1, 160
    %v1269 = vld [vmem:[%s1268] sm:$0xff]
    %v1270 = vld [vmem:[%s1268 + $0x8] sm:$0xff]
    %v1271 = vld [vmem:[%s1268 + $0x10] sm:$0xff]
    %v1272 = vld [vmem:[%s1268 + $0x18] sm:$0xff]
    %v1273 = vld [vmem:[%s1268 + $0x20] sm:$0xff]
    %v1274 = vmul.f32 %v1263, %v1269
    %v1275 = vmul.f32 %v1264, %v1270
    %v1276 = vmul.f32 %v1265, %v1271
    %v1277 = vmul.f32 %v1266, %v1272
    %v1278 = vmul.f32 %v1267, %v1273
    %v1279 = vsel %vm62, %v1274, 0.0
    %1280 = vadd.xlane.f32.xlu0 %v1279
    %v1281 = vpop.xlane.xlu0 %1280
    %v1282 = vsel %vm62, %v1275, 0.0
    %1283 = vadd.xlane.f32.xlu0 %v1282
    %v1284 = vpop.xlane.xlu0 %1283
    %v1285 = vsel %vm62, %v1276, 0.0
    %1286 = vadd.xlane.f32.xlu0 %v1285
    %v1287 = vpop.xlane.xlu0 %1286
    %v1288 = vsel %vm62, %v1277, 0.0
    %1289 = vadd.xlane.f32.xlu0 %v1288
    %v1290 = vpop.xlane.xlu0 %1289
    %v1291 = vsel %vm62, %v1278, 0.0
    %1292 = vadd.xlane.f32.xlu0 %v1291
    %v1293 = vpop.xlane.xlu0 %1292
    %v1294 = vadd.f32 %v1281, %v47
    %v1295 = vadd.f32 %v1284, %v48
    %v1296 = vadd.f32 %v1287, %v49
    %v1297 = vadd.f32 %v1290, %v50
    %v1298 = vadd.f32 %v1293, %v51
    %v1299 = vxor.u32 %v1294, 2147483648
    %v1300 = vxor.u32 %v1295, 2147483648
    %v1301 = vxor.u32 %v1296, 2147483648
    %v1302 = vxor.u32 %v1297, 2147483648
    %v1303 = vxor.u32 %v1298, 2147483648
    %v1304 = vmul.f32 %v1299, 1.442695
    %v1305 = vpow.pop %v1304
    %v1306 = vmul.f32 %v1300, 1.442695
    %v1307 = vpow.pop %v1306
    %v1308 = vmul.f32 %v1301, 1.442695
    %v1309 = vpow.pop %v1308
    %v1310 = vmul.f32 %v1302, 1.442695
    %v1311 = vpow.pop %v1310
    %v1312 = vmul.f32 %v1303, 1.442695
    %v1313 = vpow.pop %v1312
    %v1314 = vadd.f32 %v1305, 1.0
    %v1315 = vadd.f32 %v1307, 1.0
    %v1316 = vadd.f32 %v1309, 1.0
    %v1317 = vadd.f32 %v1311, 1.0
    %v1318 = vadd.f32 %v1313, 1.0
    %v1319 = vrcp.pop %v1314
    %v1320 = vmul.f32 %v1314, %v1319
    %v1321 = vsub.f32 1.0, %v1320
    %v1322 = vmul.f32 %v1319, %v1321
    %v1323 = vadd.f32 %v1319, %v1322
    %vm1324 = vweird.f32 %v1314
    %vm1325 = vweird.f32 %v1319
    %vm1326 = vmor %vm1324, %vm1325
    %v1327 = vsel %vm1326, %v1319, %v1323
    %v1328 = vand.u32 2147483647, %v1314
    %vm1329 = vcmp.eq.f32.partialorder %v1328, 8.507059e+37
    %v1330 = vand.u32 %v1314, 2147483648
    %v1331 = vor.u32 1.1754944e-38, %v1330
    %v1332 = vsel %vm1329, %v1331, %v1327
    %v1333 = vmul.f32 1.0, %v1332
    %v1334 = vrcp.pop %v1315
    %v1335 = vmul.f32 %v1315, %v1334
    %v1336 = vsub.f32 1.0, %v1335
    %v1337 = vmul.f32 %v1334, %v1336
    %v1338 = vadd.f32 %v1334, %v1337
    %vm1339 = vweird.f32 %v1315
    %vm1340 = vweird.f32 %v1334
    %vm1341 = vmor %vm1339, %vm1340
    %v1342 = vsel %vm1341, %v1334, %v1338
    %v1343 = vand.u32 2147483647, %v1315
    %vm1344 = vcmp.eq.f32.partialorder %v1343, 8.507059e+37
    %v1345 = vand.u32 %v1315, 2147483648
    %v1346 = vor.u32 1.1754944e-38, %v1345
    %v1347 = vsel %vm1344, %v1346, %v1342
    %v1348 = vmul.f32 1.0, %v1347
    %v1349 = vrcp.pop %v1316
    %v1350 = vmul.f32 %v1316, %v1349
    %v1351 = vsub.f32 1.0, %v1350
    %v1352 = vmul.f32 %v1349, %v1351
    %v1353 = vadd.f32 %v1349, %v1352
    %vm1354 = vweird.f32 %v1316
    %vm1355 = vweird.f32 %v1349
    %vm1356 = vmor %vm1354, %vm1355
    %v1357 = vsel %vm1356, %v1349, %v1353
    %v1358 = vand.u32 2147483647, %v1316
    %vm1359 = vcmp.eq.f32.partialorder %v1358, 8.507059e+37
    %v1360 = vand.u32 %v1316, 2147483648
    %v1361 = vor.u32 1.1754944e-38, %v1360
    %v1362 = vsel %vm1359, %v1361, %v1357
    %v1363 = vmul.f32 1.0, %v1362
    %v1364 = vrcp.pop %v1317
    %v1365 = vmul.f32 %v1317, %v1364
    %v1366 = vsub.f32 1.0, %v1365
    %v1367 = vmul.f32 %v1364, %v1366
    %v1368 = vadd.f32 %v1364, %v1367
    %vm1369 = vweird.f32 %v1317
    %vm1370 = vweird.f32 %v1364
    %vm1371 = vmor %vm1369, %vm1370
    %v1372 = vsel %vm1371, %v1364, %v1368
    %v1373 = vand.u32 2147483647, %v1317
    %vm1374 = vcmp.eq.f32.partialorder %v1373, 8.507059e+37
    %v1375 = vand.u32 %v1317, 2147483648
    %v1376 = vor.u32 1.1754944e-38, %v1375
    %v1377 = vsel %vm1374, %v1376, %v1372
    %v1378 = vmul.f32 1.0, %v1377
    %v1379 = vrcp.pop %v1318
    %v1380 = vmul.f32 %v1318, %v1379
    %v1381 = vsub.f32 1.0, %v1380
    %v1382 = vmul.f32 %v1379, %v1381
    %v1383 = vadd.f32 %v1379, %v1382
    %vm1384 = vweird.f32 %v1318
    %vm1385 = vweird.f32 %v1379
    %vm1386 = vmor %vm1384, %vm1385
    %v1387 = vsel %vm1386, %v1379, %v1383
    %v1388 = vand.u32 2147483647, %v1318
    %vm1389 = vcmp.eq.f32.partialorder %v1388, 8.507059e+37
    %v1390 = vand.u32 %v1318, 2147483648
    %v1391 = vor.u32 1.1754944e-38, %v1390
    %v1392 = vsel %vm1389, %v1391, %v1387
    %v1393 = vmul.f32 1.0, %v1392
    %s1394 = scalar_lea.vmem %s3, 160
    %v1395 = vld [vmem:[%s1394] sm:$0xff]
    %v1396 = vld [vmem:[%s1394 + $0x8] sm:$0xff]
    %v1397 = vld [vmem:[%s1394 + $0x10] sm:$0xff]
    %v1398 = vld [vmem:[%s1394 + $0x18] sm:$0xff]
    %v1399 = vld [vmem:[%s1394 + $0x20] sm:$0xff]
    %v1401 = vsel %vm62, %v1263, 0
    %v1404 = vsel %vm62, %v1264, 0
    %v1407 = vsel %vm62, %v1265, 0
    %v1410 = vsel %vm62, %v1266, 0
    %v1413 = vsel %vm62, %v1267, 0
    %1415 = vmatpush.msra.mxu0 0.0
    %1416 = vmatpush.msra.mxu0 0.0
    %1417 = vmatpush.msra.mxu0 0.0
    %1418 = vmatpush.msra.mxu0 0.0
    %1419 = vmatpush.msra.mxu0 0.0
    %1420 = vmatpush.msra.mxu0 0.0
    %1421 = vmatpush.msra.mxu0 0.0
    %1422 = vmatpush.msra.mxu0 0.0
    %1423 = vmatpush.msra.mxu0 0.0
    %1424 = vmatpush.msra.mxu0 0.0
    %1425 = vmatpush.msra.mxu0 0.0
    %1426 = vmatpush.msra.mxu0 0.0
    %1427 = vmatpush.msra.mxu0 %v41
    %1428 = vmatpush.msra.mxu0 %v40
    %1429 = vmatpush.msra.mxu0 %v39
    %1430 = vmatpush.msra.mxu0 %v38
    %1431 = vmatmul.f32.gmra.mxu0 %v1401
    %v1432 = vpop.f32.mrf.mxu0
    %v1433 = vadd.f32 %v1395, %v1432
    %1434 = vmatmul.f32.gmra.mxu0 %v1404
    %v1435 = vpop.f32.mrf.mxu0
    %v1436 = vadd.f32 %v1396, %v1435
    %1437 = vmatmul.f32.gmra.mxu0 %v1407
    %v1438 = vpop.f32.mrf.mxu0
    %v1439 = vadd.f32 %v1397, %v1438
    %1440 = vmatmul.f32.gmra.mxu0 %v1410
    %v1441 = vpop.f32.mrf.mxu0
    %v1442 = vadd.f32 %v1398, %v1441
    %1443 = vmatmul.f32.gmra.mxu0 %v1413
    %v1444 = vpop.f32.mrf.mxu0
    %v1445 = vadd.f32 %v1399, %v1444
    %1446 = vdwg.mxu0
    %vm1447 = vcmp.ge.f32.partialorder %v1433, 0.0
    %vm1448 = vcmp.ge.f32.partialorder %v1436, 0.0
    %vm1449 = vcmp.ge.f32.partialorder %v1439, 0.0
    %vm1450 = vcmp.ge.f32.partialorder %v1442, 0.0
    %vm1451 = vcmp.ge.f32.partialorder %v1445, 0.0
    %v1452 = vmul.f32 %v235, %v1433
    %v1453 = vmul.f32 %v235, %v1436
    %v1454 = vmul.f32 %v235, %v1439
    %v1455 = vmul.f32 %v235, %v1442
    %v1456 = vmul.f32 %v235, %v1445
    %v1457 = vsel %vm1447, %v1433, %v1452
    %v1458 = vsel %vm1448, %v1436, %v1453
    %v1459 = vsel %vm1449, %v1439, %v1454
    %v1460 = vsel %vm1450, %v1442, %v1455
    %v1461 = vsel %vm1451, %v1445, %v1456
    %1463 = vset.pattern.permute.xlu0 4
    %1464 = vperm.xlu0 %1463, %v1333
    %v1465 = vpop.permute.xlu0 %1464
    %1468 = vset.pattern.permute.xlu0 4
    %1469 = vperm.xlu0 %1468, %v1348
    %v1470 = vpop.permute.xlu0 %1469
    %1473 = vset.pattern.permute.xlu0 4
    %1474 = vperm.xlu0 %1473, %v1363
    %v1475 = vpop.permute.xlu0 %1474
    %1478 = vset.pattern.permute.xlu0 4
    %1479 = vperm.xlu0 %1478, %v1378
    %v1480 = vpop.permute.xlu0 %1479
    %1483 = vset.pattern.permute.xlu0 4
    %1484 = vperm.xlu0 %1483, %v1393
    %v1485 = vpop.permute.xlu0 %1484
    %v1487 = vmul.f32 %v1465, %v1457
    %v1488 = vmul.f32 %v1470, %v1458
    %v1489 = vmul.f32 %v1475, %v1459
    %v1490 = vmul.f32 %v1480, %v1460
    %v1491 = vmul.f32 %v1485, %v1461
    %v1492 = vadd.f32 %v1263, %v1487
    %v1493 = vadd.f32 %v1264, %v1488
    %v1494 = vadd.f32 %v1265, %v1489
    %v1495 = vadd.f32 %v1266, %v1490
    %v1496 = vadd.f32 %v1267, %v1491
    %v1497 = vmul.f32 %v1492, %v1492
    %v1498 = vmul.f32 %v1493, %v1493
    %v1499 = vmul.f32 %v1494, %v1494
    %v1500 = vmul.f32 %v1495, %v1495
    %v1501 = vmul.f32 %v1496, %v1496
    %v1502 = vsel %vm62, %v1497, 0.0
    %1503 = vadd.xlane.f32.xlu0 %v1502
    %v1504 = vpop.xlane.xlu0 %1503
    %v1505 = vsel %vm62, %v1498, 0.0
    %1506 = vadd.xlane.f32.xlu0 %v1505
    %v1507 = vpop.xlane.xlu0 %1506
    %v1508 = vsel %vm62, %v1499, 0.0
    %1509 = vadd.xlane.f32.xlu0 %v1508
    %v1510 = vpop.xlane.xlu0 %1509
    %v1511 = vsel %vm62, %v1500, 0.0
    %1512 = vadd.xlane.f32.xlu0 %v1511
    %v1513 = vpop.xlane.xlu0 %1512
    %v1514 = vsel %vm62, %v1501, 0.0
    %1515 = vadd.xlane.f32.xlu0 %v1514
    %v1516 = vpop.xlane.xlu0 %1515
    %v1517 = vrsqrt.pop %v1504
    %v1518 = vmul.f32 %v1517, %v1504
    %v1519 = vmul.f32 %v1518, %v1517
    %v1520 = vmul.f32 0.5, %v1519
    %v1521 = vsub.f32 1.5, %v1520
    %v1522 = vmul.f32 %v1517, %v1521
    %vm1523 = vweird.f32 %v1504
    %vm1524 = vweird.f32 %v1517
    %vm1525 = vmor %vm1523, %vm1524
    %v1526 = vsel %vm1525, %v1517, %v1522
    %v1527 = vrsqrt.pop %v1507
    %v1528 = vmul.f32 %v1527, %v1507
    %v1529 = vmul.f32 %v1528, %v1527
    %v1530 = vmul.f32 0.5, %v1529
    %v1531 = vsub.f32 1.5, %v1530
    %v1532 = vmul.f32 %v1527, %v1531
    %vm1533 = vweird.f32 %v1507
    %vm1534 = vweird.f32 %v1527
    %vm1535 = vmor %vm1533, %vm1534
    %v1536 = vsel %vm1535, %v1527, %v1532
    %v1537 = vrsqrt.pop %v1510
    %v1538 = vmul.f32 %v1537, %v1510
    %v1539 = vmul.f32 %v1538, %v1537
    %v1540 = vmul.f32 0.5, %v1539
    %v1541 = vsub.f32 1.5, %v1540
    %v1542 = vmul.f32 %v1537, %v1541
    %vm1543 = vweird.f32 %v1510
    %vm1544 = vweird.f32 %v1537
    %vm1545 = vmor %vm1543, %vm1544
    %v1546 = vsel %vm1545, %v1537, %v1542
    %v1547 = vrsqrt.pop %v1513
    %v1548 = vmul.f32 %v1547, %v1513
    %v1549 = vmul.f32 %v1548, %v1547
    %v1550 = vmul.f32 0.5, %v1549
    %v1551 = vsub.f32 1.5, %v1550
    %v1552 = vmul.f32 %v1547, %v1551
    %vm1553 = vweird.f32 %v1513
    %vm1554 = vweird.f32 %v1547
    %vm1555 = vmor %vm1553, %vm1554
    %v1556 = vsel %vm1555, %v1547, %v1552
    %v1557 = vrsqrt.pop %v1516
    %v1558 = vmul.f32 %v1557, %v1516
    %v1559 = vmul.f32 %v1558, %v1557
    %v1560 = vmul.f32 0.5, %v1559
    %v1561 = vsub.f32 1.5, %v1560
    %v1562 = vmul.f32 %v1557, %v1561
    %vm1563 = vweird.f32 %v1516
    %vm1564 = vweird.f32 %v1557
    %vm1565 = vmor %vm1563, %vm1564
    %v1566 = vsel %vm1565, %v1557, %v1562
    %v1567 = vmul.f32 %v1492, %v1526
    %v1568 = vmul.f32 %v1493, %v1536
    %v1569 = vmul.f32 %v1494, %v1546
    %v1570 = vmul.f32 %v1495, %v1556
    %v1571 = vmul.f32 %v1496, %v1566
    %v1572 = vld [vmem:[%s4] sm:$0xff]
    %v1573 = vld [vmem:[%s4 + $0x8] sm:$0xff]
    %v1574 = vld [vmem:[%s4 + $0x10] sm:$0xff]
    %v1575 = vld [vmem:[%s4 + $0x18] sm:$0xff]
    %v1576 = vld [vmem:[%s4 + $0x20] sm:$0xff]
    %v1577 = vmul.f32 %v1567, %v1572
    %v1578 = vmul.f32 %v1568, %v1573
    %v1579 = vmul.f32 %v1569, %v1574
    %v1580 = vmul.f32 %v1570, %v1575
    %v1581 = vmul.f32 %v1571, %v1576
    %v1582 = vsel %vm62, %v1577, 0.0
    %1583 = vadd.xlane.f32.xlu0 %v1582
    %v1584 = vpop.xlane.xlu0 %1583
    %v1585 = vsel %vm62, %v1578, 0.0
    %1586 = vadd.xlane.f32.xlu0 %v1585
    %v1587 = vpop.xlane.xlu0 %1586
    %v1588 = vsel %vm62, %v1579, 0.0
    %1589 = vadd.xlane.f32.xlu0 %v1588
    %v1590 = vpop.xlane.xlu0 %1589
    %v1591 = vsel %vm62, %v1580, 0.0
    %1592 = vadd.xlane.f32.xlu0 %v1591
    %v1593 = vpop.xlane.xlu0 %1592
    %v1594 = vsel %vm62, %v1581, 0.0
    %1595 = vadd.xlane.f32.xlu0 %v1594
    %v1596 = vpop.xlane.xlu0 %1595
    %vm1597 = vcmask 1043456
    %v1598 = vsel %vm1597, %v1590, -inf
    %v1599 = vmax.f32 %v1584, %v1587
    %v1600 = vmax.f32 %v1599, %v1598
    %v1601 = vrot.slane %v1600, 4
    %v1602 = vmax.f32 %v1600, %v1601
    %v1603 = vrot.slane %v1602, 2
    %v1604 = vmax.f32 %v1602, %v1603
    %v1605 = vrot.slane %v1604, 1
    %v1606 = vmax.f32 %v1604, %v1605
    %v1607 = vsub.f32 %v1584, %v1606
    %v1608 = vsub.f32 %v1587, %v1606
    %v1609 = vsub.f32 %v1590, %v1606
    %v1610 = vmul.f32 %v1607, 1.442695
    %v1611 = vpow.pop %v1610
    %v1612 = vmul.f32 %v1608, 1.442695
    %v1613 = vpow.pop %v1612
    %v1614 = vmul.f32 %v1609, 1.442695
    %v1615 = vpow.pop %v1614
    %v1616 = vadd.f32 %v1611, %v1613
    %v1617 = vsel %vm1597, %v1615, 0.0
    %v1618 = vadd.f32 %v1616, %v1617
    %v1619 = vrot.slane %v1618, 4
    %v1620 = vadd.f32 %v1618, %v1619
    %v1621 = vrot.slane %v1620, 2
    %v1622 = vadd.f32 %v1620, %v1621
    %v1623 = vrot.slane %v1622, 1
    %v1624 = vadd.f32 %v1622, %v1623
    %v1625 = vrcp.pop %v1624
    %v1626 = vmul.f32 %v1624, %v1625
    %v1627 = vsub.f32 1.0, %v1626
    %v1628 = vmul.f32 %v1625, %v1627
    %v1629 = vadd.f32 %v1625, %v1628
    %vm1630 = vweird.f32 %v1624
    %vm1631 = vweird.f32 %v1625
    %vm1632 = vmor %vm1630, %vm1631
    %v1633 = vsel %vm1632, %v1625, %v1629
    %v1634 = vand.u32 2147483647, %v1624
    %vm1635 = vcmp.eq.f32.partialorder %v1634, 8.507059e+37
    %v1636 = vand.u32 %v1624, 2147483648
    %v1637 = vor.u32 1.1754944e-38, %v1636
    %v1638 = vsel %vm1635, %v1637, %v1633
    %v1639 = vmul.f32 %v1611, %v1638
    %v1640 = vmul.f32 %v1613, %v1638
    %v1641 = vmul.f32 %v1615, %v1638
    %v1642 = vmul.f32 %v1639, %v1567
    %v1643 = vmul.f32 %v1640, %v1568
    %v1644 = vmul.f32 %v1641, %v1569
    %v1645 = vsel %vm62, %v1642, 0.0
    %v1646 = vsel %vm62, %v1643, 0.0
    %v1647 = vadd.f32 %v1645, %v1646
    %vm1648 = vcmask 257024
    %v1649 = vsel %vm1648, %v1644, 0.0
    %v1650 = vadd.f32 %v1647, %v1649
    %v1651 = vrot.slane %v1650, 4
    %v1652 = vadd.f32 %v1650, %v1651
    %v1653 = vrot.slane %v1652, 2
    %v1654 = vadd.f32 %v1652, %v1653
    %v1655 = vrot.slane %v1654, 1
    %v1656 = vadd.f32 %v1654, %v1655
    %vm1657 = vcmask 1047556
    %v1658 = vsel %vm1657, %v1590, -inf
    %v1659 = vmax.f32 %v1658, %v1593
    %v1660 = vmax.f32 %v1659, %v1596
    %v1661 = vrot.slane %v1660, 4
    %v1662 = vmax.f32 %v1660, %v1661
    %v1663 = vrot.slane %v1662, 2
    %v1664 = vmax.f32 %v1662, %v1663
    %v1665 = vrot.slane %v1664, 1
    %v1666 = vmax.f32 %v1664, %v1665
    %v1667 = vsub.f32 %v1590, %v1666
    %v1668 = vsub.f32 %v1593, %v1666
    %v1669 = vsub.f32 %v1596, %v1666
    %v1670 = vmul.f32 %v1667, 1.442695
    %v1671 = vpow.pop %v1670
    %v1672 = vmul.f32 %v1668, 1.442695
    %v1673 = vpow.pop %v1672
    %v1674 = vmul.f32 %v1669, 1.442695
    %v1675 = vpow.pop %v1674
    %v1679 = vrot.slane %v1671, 4
    %v1680 = vrot.slane %v1673, 4
    %v1681 = vsel %vm1597, %v1679, %v1680
    %v1682 = vrot.slane %v1675, 4
    %v1683 = vsel %vm1597, %v1680, %v1682
    %v1687 = vadd.f32 %v1681, %v1683
    %v1688 = vsel %vm1597, %v1682, 0.0
    %v1689 = vadd.f32 %v1687, %v1688
    %v1690 = vrot.slane %v1689, 4
    %v1691 = vadd.f32 %v1689, %v1690
    %v1692 = vrot.slane %v1691, 2
    %v1693 = vadd.f32 %v1691, %v1692
    %v1694 = vrot.slane %v1693, 1
    %v1695 = vadd.f32 %v1693, %v1694
    %v1696 = vrcp.pop %v1695
    %v1697 = vmul.f32 %v1695, %v1696
    %v1698 = vsub.f32 1.0, %v1697
    %v1699 = vmul.f32 %v1696, %v1698
    %v1700 = vadd.f32 %v1696, %v1699
    %vm1701 = vweird.f32 %v1695
    %vm1702 = vweird.f32 %v1696
    %vm1703 = vmor %vm1701, %vm1702
    %v1704 = vsel %vm1703, %v1696, %v1700
    %v1705 = vand.u32 2147483647, %v1695
    %vm1706 = vcmp.eq.f32.partialorder %v1705, 8.507059e+37
    %v1707 = vand.u32 %v1695, 2147483648
    %v1708 = vor.u32 1.1754944e-38, %v1707
    %v1709 = vsel %vm1706, %v1708, %v1704
    %v1710 = vmul.f32 %v1671, %v1709
    %v1711 = vmul.f32 %v1673, %v1709
    %v1712 = vmul.f32 %v1675, %v1709
    %v1713 = vmul.f32 %v1710, %v1569
    %v1714 = vmul.f32 %v1711, %v1570
    %v1715 = vmul.f32 %v1712, %v1571
    %v1719 = vrot.slane %v1713, 4
    %v1720 = vrot.slane %v1714, 4
    %v1721 = vsel %vm1597, %v1719, %v1720
    %v1722 = vrot.slane %v1715, 4
    %v1723 = vsel %vm1597, %v1720, %v1722
    %v1727 = vsel %vm62, %v1721, 0.0
    %v1728 = vsel %vm62, %v1723, 0.0
    %v1729 = vadd.f32 %v1727, %v1728
    %v1730 = vsel %vm1648, %v1722, 0.0
    %v1731 = vadd.f32 %v1729, %v1730
    %v1732 = vrot.slane %v1731, 4
    %v1733 = vadd.f32 %v1731, %v1732
    %v1734 = vrot.slane %v1733, 2
    %v1735 = vadd.f32 %v1733, %v1734
    %v1736 = vrot.slane %v1735, 1
    %v1737 = vadd.f32 %v1735, %v1736
    %vm1738 = vcmask 1040384
    %v1739 = vsel %vm1738, %v1656, %v1737
    %v1740 = vld [vmem:[%s5] sm:$0x3]
    %v1741 = vld [vmem:[%s8] sm:$0xff]
    %v1742 = vld [vmem:[%s8 + $0x8] sm:$0xff]
    %v1743 = vld [vmem:[%s8 + $0x10] sm:$0xff]
    %v1744 = vld [vmem:[%s8 + $0x18] sm:$0xff]
    %v1746 = vsel %vm62, %v1739, 0
    %1748 = vmatpush.msra.mxu0 0.0
    %1749 = vmatpush.msra.mxu0 0.0
    %1750 = vmatpush.msra.mxu0 0.0
    %1751 = vmatpush.msra.mxu0 0.0
    %1752 = vmatpush.msra.mxu0 0.0
    %1753 = vmatpush.msra.mxu0 0.0
    %1754 = vmatpush.msra.mxu0 0.0
    %1755 = vmatpush.msra.mxu0 0.0
    %1756 = vmatpush.msra.mxu0 0.0
    %1757 = vmatpush.msra.mxu0 0.0
    %1758 = vmatpush.msra.mxu0 0.0
    %1759 = vmatpush.msra.mxu0 0.0
    %1760 = vmatpush.msra.mxu0 %v1744
    %1761 = vmatpush.msra.mxu0 %v1743
    %1762 = vmatpush.msra.mxu0 %v1742
    %1763 = vmatpush.msra.mxu0 %v1741
    %1764 = vmatmul.f32.gmra.mxu0 %v1746
    %v1765 = vpop.f32.mrf.mxu0
    %v1766 = vadd.f32 0.0, %v1765
    %1767 = vdwg.mxu0
    %v1768 = vadd.f32 %v1740, %v1766
    %v1769 = vld [vmem:[%s9] sm:$0x1]
    %v1771 = vperm.slane %v1769, 0
    %v1773 = vadd.f32 %v1768, %v1771
    %vm1774 = vcmask 254976
    %1775 = vst.msk [vmem:[#allocation3] sm:$0x3] %vm1774, %v1773
    // Predicated region
    $region42: #{tpu_custom_call.1} parent=1 // pred_check
      _
    $region43: #{tpu_custom_call.1} parent=1 // pred_check_branch
      %1777 = sbr.rel (0) target = $region45
    $region44: #{tpu_custom_call.1} parent=1 // pred_region
      %1779 = vsyncadd [#allocation4], 0
      %s1781 = sshll.u32 [#allocation3], 4
      %s1782 = int_to_ptr.vmem [resolvable:$true] %s1781
      %s1783 = sshll.u32 %s10, 4
      %s1784 = int_to_ptr.hbm [resolvable:$true] %s1783
      %1786 = dma.vmem_to_hbm [thread:$0]  %s1782, 32, %s1784, [#allocation4]
    $region45: #{tpu_custom_call.1} parent=1 // pred_fallthru
      _
    // Predicated region
    $region46: #{tpu_custom_call.1} parent=1 // pred_check
      _
    $region47: #{tpu_custom_call.1} parent=1 // pred_check_branch
      %1788 = sbr.rel (0) target = $region49
    $region48: #{tpu_custom_call.1} parent=1 // pred_region
      %1790 = dma.done [#allocation4], 32
    $region49: #{tpu_custom_call.1} parent=1 // pred_fallthru
      _
    %1791 = vsyncpa [#allocation4], 1

</llo_original>
